<compile_context>
chip_gen: v6e
topology: v6e:2x2x1
jax: 0.10.0
libtpu: 0.0.40
codegen_flags: <defaults>
</compile_context>

<pallas_src>
import functools

import jax
import jax.numpy as jnp
from jax.experimental import pallas as pl
from jax.experimental.pallas import tpu as pltpu

HIDDEN = 128
WIDTH = 2 * HIDDEN                       # fused chain width (256)
N_BLOCKS = 3
LAYERS_PER_BLOCK = 3
N_LAYERS = 1 + N_BLOCKS * LAYERS_PER_BLOCK + 3   # fc1 + 9 residual + fc2 + fc3 + fc4 = 13
FC2_IDX = 1 + N_BLOCKS * LAYERS_PER_BLOCK        # 10
FC3_IDX = FC2_IDX + 1                            # 11
FC4_IDX = FC3_IDX + 1                            # 12


def actor_kernel(x_ref, w_ref, b_ref, out_ref):
    """Fused Actor forward (Net + tanh*4), fully resident in VMEM.

    x_ref:   (Bp, 256) f32       -- [x_A | x_B | zero pad], batch padded to 8k
    w_ref:   (13, 256, 256) bf16 -- packed / block-diagonal weights, (in, out)
    b_ref:   (13, 256) f32       -- packed biases
    out_ref: (Bp, 256) f32       -- tanh(fc4)*4; columns >= action_size are 0
    """

    def dense(h_f32, idx):
        # bf16 MXU inputs, f32 accumulation; activations stay f32 (v5e-friendly).
        acc = jnp.dot(h_f32.astype(jnp.bfloat16), w_ref[idx],
                      preferred_element_type=jnp.float32)
        return acc + b_ref[idx:idx + 1, :]

    # fused fc1_A / fc1_B + SiLU
    h = jax.nn.silu(dense(x_ref[...], 0))

    # 3 residual blocks; block-diagonal weights keep the A/B branches independent
    for blk in range(N_BLOCKS):
        t = h
        for layer in range(LAYERS_PER_BLOCK):
            idx = 1 + blk * LAYERS_PER_BLOCK + layer
            t = dense(t, idx)
            if layer < 2:                 # ReLU after first two linears only
                t = jnp.maximum(t, 0.0)
        h = h + t

    # fused fc2_A / fc2_B + SiLU, then fc3 + SiLU (the concat is implicit)
    h = jax.nn.silu(dense(h, FC2_IDX))
    h = jax.nn.silu(dense(h, FC3_IDX))

    # fc4 (output columns zero-padded to 256), then Actor's tanh(x) * 4
    h = dense(h, FC4_IDX)
    out_ref[...] = jnp.tanh(h) * 4.0


def init_params(key, state_size, action_size):
    """Deterministic synthetic parameters. Weights stored as (in, out), f32."""
    sA, sB = state_size
    ks = jax.random.split(key, 32)
    it = iter(ks)

    def w(shape, scale=0.05):
        return scale * jax.random.normal(next(it), shape, jnp.float32)

    return {
        "wA1": w((sA, HIDDEN)), "bA1": w((1, HIDDEN)),
        "rAw": w((N_BLOCKS * LAYERS_PER_BLOCK, HIDDEN, HIDDEN)),
        "rAb": w((N_BLOCKS * LAYERS_PER_BLOCK, HIDDEN)),
        "wA2": w((HIDDEN, HIDDEN)), "bA2": w((1, HIDDEN)),
        "wB1": w((sB, HIDDEN)), "bB1": w((1, HIDDEN)),
        "rBw": w((N_BLOCKS * LAYERS_PER_BLOCK, HIDDEN, HIDDEN)),
        "rBb": w((N_BLOCKS * LAYERS_PER_BLOCK, HIDDEN)),
        "wB2": w((HIDDEN, HIDDEN)), "bB2": w((1, HIDDEN)),
        "w3": w((2 * HIDDEN, 2 * HIDDEN)), "b3": w((1, 2 * HIDDEN)),
        "w4": w((2 * HIDDEN, action_size)), "b4": w((1, action_size)),
    }


def pack_params(params, state_size, action_size):
    """Pack all layers into one bf16 weight slab + one f32 bias slab (done once)."""
    sA, sB = state_size
    W = jnp.zeros((N_LAYERS, WIDTH, WIDTH), jnp.float32)
    Bv = jnp.zeros((N_LAYERS, WIDTH), jnp.float32)

    # layer 0: fused fc1 (block placement matches [x_A | x_B] input layout)
    W = W.at[0, :sA, :HIDDEN].set(params["wA1"])
    W = W.at[0, sA:sA + sB, HIDDEN:].set(params["wB1"])
    Bv = Bv.at[0, :HIDDEN].set(params["bA1"][0])
    Bv = Bv.at[0, HIDDEN:].set(params["bB1"][0])

    # layers 1..9: residual linears, block-diagonal
    for i in range(N_BLOCKS * LAYERS_PER_BLOCK):
        W = W.at[1 + i, :HIDDEN, :HIDDEN].set(params["rAw"][i])
        W = W.at[1 + i, HIDDEN:, HIDDEN:].set(params["rBw"][i])
        Bv = Bv.at[1 + i, :HIDDEN].set(params["rAb"][i])
        Bv = Bv.at[1 + i, HIDDEN:].set(params["rBb"][i])

    # layer 10: fused fc2, block-diagonal
    W = W.at[FC2_IDX, :HIDDEN, :HIDDEN].set(params["wA2"])
    W = W.at[FC2_IDX, HIDDEN:, HIDDEN:].set(params["wB2"])
    Bv = Bv.at[FC2_IDX, :HIDDEN].set(params["bA2"][0])
    Bv = Bv.at[FC2_IDX, HIDDEN:].set(params["bB2"][0])

    # layer 11: fc3 (full 256x256)
    W = W.at[FC3_IDX].set(params["w3"])
    Bv = Bv.at[FC3_IDX].set(params["b3"][0])

    # layer 12: fc4, output columns padded action_size -> 256
    W = W.at[FC4_IDX, :, :action_size].set(params["w4"])
    Bv = Bv.at[FC4_IDX, :action_size].set(params["b4"][0])

    return W.astype(jnp.bfloat16), Bv


@functools.partial(jax.jit, static_argnames=("state_size", "action_size"))
def actor_forward(x_A, x_B, w_packed, b_packed, state_size, action_size):
    sA, sB = state_size
    B = x_A.shape[0]
    Bp = ((B + 7) // 8) * 8                       # sublane-aligned batch
    # flatten (x.view(B,-1)) and concat the branches, zero-pad lanes to 256
    x = jnp.zeros((Bp, WIDTH), jnp.float32)
    x = x.at[:B, :sA].set(x_A.reshape(B, -1))
    x = x.at[:B, sA:sA + sB].set(x_B.reshape(B, -1))

    # Single-invocation kernel: whole net fits in <2 MiB of VMEM, 3 input DMAs.
    # Note: for large batches, add a batch grid axis (dimension_semantics=("parallel",))
    # with weight index_maps returning 0 so v7x's two TensorCores split the batch.
    vmem = pl.BlockSpec(memory_space=pltpu.MemorySpace.VMEM)
    out = pl.pallas_call(
        actor_kernel,
        out_shape=jax.ShapeDtypeStruct((Bp, WIDTH), jnp.float32),
        in_specs=[vmem, vmem, vmem],
        out_specs=vmem,
    )(x, w_packed, b_packed)
    return out[:B, :action_size]


def actor_forward_ref(x_A, x_B, params):
    """Pure-JAX reference (same bf16-weight / f32-accumulate arithmetic)."""
    def dense(h, w, b):
        return jnp.dot(h.astype(jnp.bfloat16), w.astype(jnp.bfloat16),
                       preferred_element_type=jnp.float32) + b

    def branch(x, w1, b1, rw, rb, w2, b2):
        h = jax.nn.silu(dense(x, w1, b1))
        for blk in range(N_BLOCKS):
            t = h
            for layer in range(LAYERS_PER_BLOCK):
                idx = blk * LAYERS_PER_BLOCK + layer
                t = dense(t, rw[idx], rb[idx])
                if layer < 2:
                    t = jnp.maximum(t, 0.0)
            h = h + t
        return jax.nn.silu(dense(h, w2, b2))

    hA = branch(x_A.reshape(x_A.shape[0], -1), params["wA1"], params["bA1"],
                params["rAw"], params["rAb"], params["wA2"], params["bA2"])
    hB = branch(x_B.reshape(x_B.shape[0], -1), params["wB1"], params["bB1"],
                params["rBw"], params["rBb"], params["wB2"], params["bB2"])
    h = jnp.concatenate([hA, hB], axis=1)
    h = jax.nn.silu(dense(h, params["w3"], params["b3"]))
    h = dense(h, params["w4"], params["b4"])
    return jnp.tanh(h) * 4.0              # Actor: tanh then scale by 4


if __name__ == "__main__":
    state_size = (16, 24)    # flattened sizes of x_A and x_B
    action_size = 4
    batch = 2

    key = jax.random.PRNGKey(0)
    k_par, k_xa, k_xb = jax.random.split(key, 3)
    params = init_params(k_par, state_size, action_size)
    w_packed, b_packed = pack_params(params, state_size, action_size)

    x_A = jax.random.normal(k_xa, (batch, state_size[0]), jnp.float32)
    x_B = jax.random.normal(k_xb, (batch, state_size[1]), jnp.float32)

    out = actor_forward(x_A, x_B, w_packed, b_packed, state_size, action_size)
    out = jax.block_until_ready(out)

    ref = actor_forward_ref(x_A, x_B, params)
    assert out.shape == (batch, action_size), out.shape
    assert jnp.allclose(out, ref, atol=2e-2, rtol=2e-2), (out, ref)
    print("KERNEL_OK")
</pallas_src>

<mosaic_0001>
module attributes {stable_mosaic.version = 11 : i64} {
  func.func @actor_kernel(%arg0: memref<8x256xf32, #tpu.memory_space<vmem>>, %arg1: memref<13x256x256xbf16, #tpu.memory_space<vmem>>, %arg2: memref<13x256xf32, #tpu.memory_space<vmem>>, %arg3: memref<8x256xf32, #tpu.memory_space<vmem>>) attributes {dimension_semantics = [], scalar_prefetch = 0 : i64, scratch_operands = 0 : i64, tpu.core_type = #tpu.core_type<tc>} {
    %c0 = arith.constant 0 : index
    %c0_0 = arith.constant 0 : index
    %0 = vector.load %arg0[%c0, %c0_0] : memref<8x256xf32, #tpu.memory_space<vmem>>, vector<8x256xf32>
    %1 = arith.truncf %0 : vector<8x256xf32> to vector<8x256xbf16>
    %c0_1 = arith.constant 0 : index
    %c0_2 = arith.constant 0 : index
    %c0_3 = arith.constant 0 : index
    %2 = vector.load %arg1[%c0_1, %c0_2, %c0_3] : memref<13x256x256xbf16, #tpu.memory_space<vmem>>, vector<1x256x256xbf16>
    %3 = vector.shape_cast %2 : vector<1x256x256xbf16> to vector<256x256xbf16>
    %cst = arith.constant dense<0.000000e+00> : vector<8x256xf32>
    %4 = tpu.matmul %1, %3, %cst {dimension_numbers = #tpu.dot_dimension_numbers<[1], [0], [0], [1], [0, 0, 1, 1], [], []>} : vector<8x256xbf16>, vector<256x256xbf16>, vector<8x256xf32> -> vector<8x256xf32>
    %c0_4 = arith.constant 0 : index
    %c0_5 = arith.constant 0 : index
    %5 = vector.load %arg2[%c0_4, %c0_5] : memref<13x256xf32, #tpu.memory_space<vmem>>, vector<1x256xf32>
    %6 = vector.broadcast %5 : vector<1x256xf32> to vector<8x256xf32>
    %7 = arith.addf %4, %6 : vector<8x256xf32>
    %8 = arith.negf %7 : vector<8x256xf32>
    %9 = math.exp %8 : vector<8x256xf32>
    %cst_6 = arith.constant 1.000000e+00 : f32
    %10 = vector.broadcast %cst_6 : f32 to vector<8x256xf32>
    %11 = arith.addf %10, %9 : vector<8x256xf32>
    %12 = arith.divf %10, %11 : vector<8x256xf32>
    %13 = arith.mulf %7, %12 : vector<8x256xf32>
    %14 = arith.truncf %13 : vector<8x256xf32> to vector<8x256xbf16>
    %c1 = arith.constant 1 : index
    %c0_7 = arith.constant 0 : index
    %c0_8 = arith.constant 0 : index
    %15 = vector.load %arg1[%c1, %c0_7, %c0_8] : memref<13x256x256xbf16, #tpu.memory_space<vmem>>, vector<1x256x256xbf16>
    %16 = vector.shape_cast %15 : vector<1x256x256xbf16> to vector<256x256xbf16>
    %cst_9 = arith.constant dense<0.000000e+00> : vector<8x256xf32>
    %17 = tpu.matmul %14, %16, %cst_9 {dimension_numbers = #tpu.dot_dimension_numbers<[1], [0], [0], [1], [0, 0, 1, 1], [], []>} : vector<8x256xbf16>, vector<256x256xbf16>, vector<8x256xf32> -> vector<8x256xf32>
    %c1_10 = arith.constant 1 : index
    %c0_11 = arith.constant 0 : index
    %18 = vector.load %arg2[%c1_10, %c0_11] : memref<13x256xf32, #tpu.memory_space<vmem>>, vector<1x256xf32>
    %19 = vector.broadcast %18 : vector<1x256xf32> to vector<8x256xf32>
    %20 = arith.addf %17, %19 : vector<8x256xf32>
    %cst_12 = arith.constant 0.000000e+00 : f32
    %21 = vector.broadcast %cst_12 : f32 to vector<8x256xf32>
    %22 = arith.maximumf %20, %21 : vector<8x256xf32>
    %23 = arith.truncf %22 : vector<8x256xf32> to vector<8x256xbf16>
    %c2 = arith.constant 2 : index
    %c0_13 = arith.constant 0 : index
    %c0_14 = arith.constant 0 : index
    %24 = vector.load %arg1[%c2, %c0_13, %c0_14] : memref<13x256x256xbf16, #tpu.memory_space<vmem>>, vector<1x256x256xbf16>
    %25 = vector.shape_cast %24 : vector<1x256x256xbf16> to vector<256x256xbf16>
    %cst_15 = arith.constant dense<0.000000e+00> : vector<8x256xf32>
    %26 = tpu.matmul %23, %25, %cst_15 {dimension_numbers = #tpu.dot_dimension_numbers<[1], [0], [0], [1], [0, 0, 1, 1], [], []>} : vector<8x256xbf16>, vector<256x256xbf16>, vector<8x256xf32> -> vector<8x256xf32>
    %c2_16 = arith.constant 2 : index
    %c0_17 = arith.constant 0 : index
    %27 = vector.load %arg2[%c2_16, %c0_17] : memref<13x256xf32, #tpu.memory_space<vmem>>, vector<1x256xf32>
    %28 = vector.broadcast %27 : vector<1x256xf32> to vector<8x256xf32>
    %29 = arith.addf %26, %28 : vector<8x256xf32>
    %cst_18 = arith.constant 0.000000e+00 : f32
    %30 = vector.broadcast %cst_18 : f32 to vector<8x256xf32>
    %31 = arith.maximumf %29, %30 : vector<8x256xf32>
    %32 = arith.truncf %31 : vector<8x256xf32> to vector<8x256xbf16>
    %c3 = arith.constant 3 : index
    %c0_19 = arith.constant 0 : index
    %c0_20 = arith.constant 0 : index
    %33 = vector.load %arg1[%c3, %c0_19, %c0_20] : memref<13x256x256xbf16, #tpu.memory_space<vmem>>, vector<1x256x256xbf16>
    %34 = vector.shape_cast %33 : vector<1x256x256xbf16> to vector<256x256xbf16>
    %cst_21 = arith.constant dense<0.000000e+00> : vector<8x256xf32>
    %35 = tpu.matmul %32, %34, %cst_21 {dimension_numbers = #tpu.dot_dimension_numbers<[1], [0], [0], [1], [0, 0, 1, 1], [], []>} : vector<8x256xbf16>, vector<256x256xbf16>, vector<8x256xf32> -> vector<8x256xf32>
    %c3_22 = arith.constant 3 : index
    %c0_23 = arith.constant 0 : index
    %36 = vector.load %arg2[%c3_22, %c0_23] : memref<13x256xf32, #tpu.memory_space<vmem>>, vector<1x256xf32>
    %37 = vector.broadcast %36 : vector<1x256xf32> to vector<8x256xf32>
    %38 = arith.addf %35, %37 : vector<8x256xf32>
    %39 = arith.addf %13, %38 : vector<8x256xf32>
    %40 = arith.truncf %39 : vector<8x256xf32> to vector<8x256xbf16>
    %c4 = arith.constant 4 : index
    %c0_24 = arith.constant 0 : index
    %c0_25 = arith.constant 0 : index
    %41 = vector.load %arg1[%c4, %c0_24, %c0_25] : memref<13x256x256xbf16, #tpu.memory_space<vmem>>, vector<1x256x256xbf16>
    %42 = vector.shape_cast %41 : vector<1x256x256xbf16> to vector<256x256xbf16>
    %cst_26 = arith.constant dense<0.000000e+00> : vector<8x256xf32>
    %43 = tpu.matmul %40, %42, %cst_26 {dimension_numbers = #tpu.dot_dimension_numbers<[1], [0], [0], [1], [0, 0, 1, 1], [], []>} : vector<8x256xbf16>, vector<256x256xbf16>, vector<8x256xf32> -> vector<8x256xf32>
    %c4_27 = arith.constant 4 : index
    %c0_28 = arith.constant 0 : index
    %44 = vector.load %arg2[%c4_27, %c0_28] : memref<13x256xf32, #tpu.memory_space<vmem>>, vector<1x256xf32>
    %45 = vector.broadcast %44 : vector<1x256xf32> to vector<8x256xf32>
    %46 = arith.addf %43, %45 : vector<8x256xf32>
    %cst_29 = arith.constant 0.000000e+00 : f32
    %47 = vector.broadcast %cst_29 : f32 to vector<8x256xf32>
    %48 = arith.maximumf %46, %47 : vector<8x256xf32>
    %49 = arith.truncf %48 : vector<8x256xf32> to vector<8x256xbf16>
    %c5 = arith.constant 5 : index
    %c0_30 = arith.constant 0 : index
    %c0_31 = arith.constant 0 : index
    %50 = vector.load %arg1[%c5, %c0_30, %c0_31] : memref<13x256x256xbf16, #tpu.memory_space<vmem>>, vector<1x256x256xbf16>
    %51 = vector.shape_cast %50 : vector<1x256x256xbf16> to vector<256x256xbf16>
    %cst_32 = arith.constant dense<0.000000e+00> : vector<8x256xf32>
    %52 = tpu.matmul %49, %51, %cst_32 {dimension_numbers = #tpu.dot_dimension_numbers<[1], [0], [0], [1], [0, 0, 1, 1], [], []>} : vector<8x256xbf16>, vector<256x256xbf16>, vector<8x256xf32> -> vector<8x256xf32>
    %c5_33 = arith.constant 5 : index
    %c0_34 = arith.constant 0 : index
    %53 = vector.load %arg2[%c5_33, %c0_34] : memref<13x256xf32, #tpu.memory_space<vmem>>, vector<1x256xf32>
    %54 = vector.broadcast %53 : vector<1x256xf32> to vector<8x256xf32>
    %55 = arith.addf %52, %54 : vector<8x256xf32>
    %cst_35 = arith.constant 0.000000e+00 : f32
    %56 = vector.broadcast %cst_35 : f32 to vector<8x256xf32>
    %57 = arith.maximumf %55, %56 : vector<8x256xf32>
    %58 = arith.truncf %57 : vector<8x256xf32> to vector<8x256xbf16>
    %c6 = arith.constant 6 : index
    %c0_36 = arith.constant 0 : index
    %c0_37 = arith.constant 0 : index
    %59 = vector.load %arg1[%c6, %c0_36, %c0_37] : memref<13x256x256xbf16, #tpu.memory_space<vmem>>, vector<1x256x256xbf16>
    %60 = vector.shape_cast %59 : vector<1x256x256xbf16> to vector<256x256xbf16>
    %cst_38 = arith.constant dense<0.000000e+00> : vector<8x256xf32>
    %61 = tpu.matmul %58, %60, %cst_38 {dimension_numbers = #tpu.dot_dimension_numbers<[1], [0], [0], [1], [0, 0, 1, 1], [], []>} : vector<8x256xbf16>, vector<256x256xbf16>, vector<8x256xf32> -> vector<8x256xf32>
    %c6_39 = arith.constant 6 : index
    %c0_40 = arith.constant 0 : index
    %62 = vector.load %arg2[%c6_39, %c0_40] : memref<13x256xf32, #tpu.memory_space<vmem>>, vector<1x256xf32>
    %63 = vector.broadcast %62 : vector<1x256xf32> to vector<8x256xf32>
    %64 = arith.addf %61, %63 : vector<8x256xf32>
    %65 = arith.addf %39, %64 : vector<8x256xf32>
    %66 = arith.truncf %65 : vector<8x256xf32> to vector<8x256xbf16>
    %c7 = arith.constant 7 : index
    %c0_41 = arith.constant 0 : index
    %c0_42 = arith.constant 0 : index
    %67 = vector.load %arg1[%c7, %c0_41, %c0_42] : memref<13x256x256xbf16, #tpu.memory_space<vmem>>, vector<1x256x256xbf16>
    %68 = vector.shape_cast %67 : vector<1x256x256xbf16> to vector<256x256xbf16>
    %cst_43 = arith.constant dense<0.000000e+00> : vector<8x256xf32>
    %69 = tpu.matmul %66, %68, %cst_43 {dimension_numbers = #tpu.dot_dimension_numbers<[1], [0], [0], [1], [0, 0, 1, 1], [], []>} : vector<8x256xbf16>, vector<256x256xbf16>, vector<8x256xf32> -> vector<8x256xf32>
    %c7_44 = arith.constant 7 : index
    %c0_45 = arith.constant 0 : index
    %70 = vector.load %arg2[%c7_44, %c0_45] : memref<13x256xf32, #tpu.memory_space<vmem>>, vector<1x256xf32>
    %71 = vector.broadcast %70 : vector<1x256xf32> to vector<8x256xf32>
    %72 = arith.addf %69, %71 : vector<8x256xf32>
    %cst_46 = arith.constant 0.000000e+00 : f32
    %73 = vector.broadcast %cst_46 : f32 to vector<8x256xf32>
    %74 = arith.maximumf %72, %73 : vector<8x256xf32>
    %75 = arith.truncf %74 : vector<8x256xf32> to vector<8x256xbf16>
    %c8 = arith.constant 8 : index
    %c0_47 = arith.constant 0 : index
    %c0_48 = arith.constant 0 : index
    %76 = vector.load %arg1[%c8, %c0_47, %c0_48] : memref<13x256x256xbf16, #tpu.memory_space<vmem>>, vector<1x256x256xbf16>
    %77 = vector.shape_cast %76 : vector<1x256x256xbf16> to vector<256x256xbf16>
    %cst_49 = arith.constant dense<0.000000e+00> : vector<8x256xf32>
    %78 = tpu.matmul %75, %77, %cst_49 {dimension_numbers = #tpu.dot_dimension_numbers<[1], [0], [0], [1], [0, 0, 1, 1], [], []>} : vector<8x256xbf16>, vector<256x256xbf16>, vector<8x256xf32> -> vector<8x256xf32>
    %c8_50 = arith.constant 8 : index
    %c0_51 = arith.constant 0 : index
    %79 = vector.load %arg2[%c8_50, %c0_51] : memref<13x256xf32, #tpu.memory_space<vmem>>, vector<1x256xf32>
    %80 = vector.broadcast %79 : vector<1x256xf32> to vector<8x256xf32>
    %81 = arith.addf %78, %80 : vector<8x256xf32>
    %cst_52 = arith.constant 0.000000e+00 : f32
    %82 = vector.broadcast %cst_52 : f32 to vector<8x256xf32>
    %83 = arith.maximumf %81, %82 : vector<8x256xf32>
    %84 = arith.truncf %83 : vector<8x256xf32> to vector<8x256xbf16>
    %c9 = arith.constant 9 : index
    %c0_53 = arith.constant 0 : index
    %c0_54 = arith.constant 0 : index
    %85 = vector.load %arg1[%c9, %c0_53, %c0_54] : memref<13x256x256xbf16, #tpu.memory_space<vmem>>, vector<1x256x256xbf16>
    %86 = vector.shape_cast %85 : vector<1x256x256xbf16> to vector<256x256xbf16>
    %cst_55 = arith.constant dense<0.000000e+00> : vector<8x256xf32>
    %87 = tpu.matmul %84, %86, %cst_55 {dimension_numbers = #tpu.dot_dimension_numbers<[1], [0], [0], [1], [0, 0, 1, 1], [], []>} : vector<8x256xbf16>, vector<256x256xbf16>, vector<8x256xf32> -> vector<8x256xf32>
    %c9_56 = arith.constant 9 : index
    %c0_57 = arith.constant 0 : index
    %88 = vector.load %arg2[%c9_56, %c0_57] : memref<13x256xf32, #tpu.memory_space<vmem>>, vector<1x256xf32>
    %89 = vector.broadcast %88 : vector<1x256xf32> to vector<8x256xf32>
    %90 = arith.addf %87, %89 : vector<8x256xf32>
    %91 = arith.addf %65, %90 : vector<8x256xf32>
    %92 = arith.truncf %91 : vector<8x256xf32> to vector<8x256xbf16>
    %c10 = arith.constant 10 : index
    %c0_58 = arith.constant 0 : index
    %c0_59 = arith.constant 0 : index
    %93 = vector.load %arg1[%c10, %c0_58, %c0_59] : memref<13x256x256xbf16, #tpu.memory_space<vmem>>, vector<1x256x256xbf16>
    %94 = vector.shape_cast %93 : vector<1x256x256xbf16> to vector<256x256xbf16>
    %cst_60 = arith.constant dense<0.000000e+00> : vector<8x256xf32>
    %95 = tpu.matmul %92, %94, %cst_60 {dimension_numbers = #tpu.dot_dimension_numbers<[1], [0], [0], [1], [0, 0, 1, 1], [], []>} : vector<8x256xbf16>, vector<256x256xbf16>, vector<8x256xf32> -> vector<8x256xf32>
    %c10_61 = arith.constant 10 : index
    %c0_62 = arith.constant 0 : index
    %96 = vector.load %arg2[%c10_61, %c0_62] : memref<13x256xf32, #tpu.memory_space<vmem>>, vector<1x256xf32>
    %97 = vector.broadcast %96 : vector<1x256xf32> to vector<8x256xf32>
    %98 = arith.addf %95, %97 : vector<8x256xf32>
    %99 = arith.negf %98 : vector<8x256xf32>
    %100 = math.exp %99 : vector<8x256xf32>
    %cst_63 = arith.constant 1.000000e+00 : f32
    %101 = vector.broadcast %cst_63 : f32 to vector<8x256xf32>
    %102 = arith.addf %101, %100 : vector<8x256xf32>
    %103 = arith.divf %101, %102 : vector<8x256xf32>
    %104 = arith.mulf %98, %103 : vector<8x256xf32>
    %105 = arith.truncf %104 : vector<8x256xf32> to vector<8x256xbf16>
    %c11 = arith.constant 11 : index
    %c0_64 = arith.constant 0 : index
    %c0_65 = arith.constant 0 : index
    %106 = vector.load %arg1[%c11, %c0_64, %c0_65] : memref<13x256x256xbf16, #tpu.memory_space<vmem>>, vector<1x256x256xbf16>
    %107 = vector.shape_cast %106 : vector<1x256x256xbf16> to vector<256x256xbf16>
    %cst_66 = arith.constant dense<0.000000e+00> : vector<8x256xf32>
    %108 = tpu.matmul %105, %107, %cst_66 {dimension_numbers = #tpu.dot_dimension_numbers<[1], [0], [0], [1], [0, 0, 1, 1], [], []>} : vector<8x256xbf16>, vector<256x256xbf16>, vector<8x256xf32> -> vector<8x256xf32>
    %c11_67 = arith.constant 11 : index
    %c0_68 = arith.constant 0 : index
    %109 = vector.load %arg2[%c11_67, %c0_68] : memref<13x256xf32, #tpu.memory_space<vmem>>, vector<1x256xf32>
    %110 = vector.broadcast %109 : vector<1x256xf32> to vector<8x256xf32>
    %111 = arith.addf %108, %110 : vector<8x256xf32>
    %112 = arith.negf %111 : vector<8x256xf32>
    %113 = math.exp %112 : vector<8x256xf32>
    %cst_69 = arith.constant 1.000000e+00 : f32
    %114 = vector.broadcast %cst_69 : f32 to vector<8x256xf32>
    %115 = arith.addf %114, %113 : vector<8x256xf32>
    %116 = arith.divf %114, %115 : vector<8x256xf32>
    %117 = arith.mulf %111, %116 : vector<8x256xf32>
    %118 = arith.truncf %117 : vector<8x256xf32> to vector<8x256xbf16>
    %c12 = arith.constant 12 : index
    %c0_70 = arith.constant 0 : index
    %c0_71 = arith.constant 0 : index
    %119 = vector.load %arg1[%c12, %c0_70, %c0_71] : memref<13x256x256xbf16, #tpu.memory_space<vmem>>, vector<1x256x256xbf16>
    %120 = vector.shape_cast %119 : vector<1x256x256xbf16> to vector<256x256xbf16>
    %cst_72 = arith.constant dense<0.000000e+00> : vector<8x256xf32>
    %121 = tpu.matmul %118, %120, %cst_72 {dimension_numbers = #tpu.dot_dimension_numbers<[1], [0], [0], [1], [0, 0, 1, 1], [], []>} : vector<8x256xbf16>, vector<256x256xbf16>, vector<8x256xf32> -> vector<8x256xf32>
    %c12_73 = arith.constant 12 : index
    %c0_74 = arith.constant 0 : index
    %122 = vector.load %arg2[%c12_73, %c0_74] : memref<13x256xf32, #tpu.memory_space<vmem>>, vector<1x256xf32>
    %123 = vector.broadcast %122 : vector<1x256xf32> to vector<8x256xf32>
    %124 = arith.addf %121, %123 : vector<8x256xf32>
    %125 = math.tanh %124 : vector<8x256xf32>
    %cst_75 = arith.constant 4.000000e+00 : f32
    %126 = vector.broadcast %cst_75 : f32 to vector<8x256xf32>
    %127 = arith.mulf %125, %126 : vector<8x256xf32>
    %c0_76 = arith.constant 0 : index
    %c0_77 = arith.constant 0 : index
    %128 = vector.load %arg3[%c0_76, %c0_77] : memref<8x256xf32, #tpu.memory_space<vmem>>, vector<8x256xf32>
    tpu.vector_store %arg3[%c0_76, %c0_77], %127 {strides = array<i32>} : memref<8x256xf32, #tpu.memory_space<vmem>>, vector<8x256xf32>,
    return
  }
}

</mosaic_0001>

<llo_original>
// kernel: actor_forward.1
$region0: #{actor_forward.1}
  #allocation0 [shape = 'u32[]', space=smem, size = 0x4, offset = 0x4, fixed_abs, tag = 'smem constant byte address 0x4 - core index']
  #allocation1 [shape = 'u32[144,128]{1,0:T(1,128)}', space=vmem, size = 0x12000, scoped, tag = 'internal scratch']
  %s0 = inlined_call_operand.vmem [shape: f32[8,256], index: 0, kind: input, shape index: {}]
  %s1 = inlined_call_operand.hbm [shape: bf16[13,256,256], index: 1, kind: input, shape index: {}]
  %s2 = inlined_call_operand.hbm [shape: f32[13,256], index: 2, kind: input, shape index: {}]
  %s3 = inlined_call_operand.vmem [shape: f32[8,256], index: 3, kind: output, shape index: {}]
  %s4 = sld [smem:[#allocation0]]
  $region30: #{actor_forward.1} parent=0
    _
  %s6 = ssub.s32 1, %s4
  %s7 = scalar_select 0, %s6, %s4
  $region1: #{actor_forward.1} parent=0
    #allocation2 [shape = 'u8[1703936]{0}', space=vmem, size = 0x1a0000, scoped, tag = 'input window, operand 1, single buffered']
    #allocation3 [shape = 's32[1]{0}', space=sflag, size = 0x4, scoped, tag = 'scoped memory for actor_forward.1']
    #allocation4 [shape = 'u8[16384]{0}', space=vmem, size = 0x4000, scoped, tag = 'input window, operand 2, single buffered']
    #allocation5 [shape = 's32[1]{0}', space=sflag, size = 0x4, scoped, tag = 'scoped memory for actor_forward.1']
    %8 = vsyncpa [#allocation3], 0
    %9 = vsyncpa [#allocation5], 0
    // Predicated region
    $region2: #{actor_forward.1} parent=1 // pred_check
      _
    $region3: #{actor_forward.1} parent=1 // pred_check_branch
      %11 = sbr.rel (0) target = $region5
    $region4: #{actor_forward.1} parent=1 // pred_region
      _
    $region5: #{actor_forward.1} parent=1 // pred_fallthru
      _
    // Predicated region
    $region6: #{actor_forward.1} parent=1 // pred_check
      _
    $region7: #{actor_forward.1} parent=1 // pred_check_branch
      %13 = sbr.rel (0) target = $region9
    $region8: #{actor_forward.1} parent=1 // pred_region
      %s15 = ssub.s32 53248, 53248
      %16 = vsyncadd [#allocation3], %s15
      %s17 = sshll.u32 [#allocation2], 4
      %s18 = int_to_ptr.vmem [resolvable:$true] %s17
      %23 = dma.hbm_to_vmem [thread:$0]  %s1, 53248, %s18, [#allocation3], 128, 128, 8
    $region9: #{actor_forward.1} parent=1 // pred_fallthru
      _
    // Predicated region
    $region10: #{actor_forward.1} parent=1 // pred_check
      _
    $region11: #{actor_forward.1} parent=1 // pred_check_branch
      %25 = sbr.rel (0) target = $region13
    $region12: #{actor_forward.1} parent=1 // pred_region
      %s27 = ssub.s32 512, 512
      %28 = vsyncadd [#allocation5], %s27
      %s29 = sshll.u32 [#allocation4], 4
      %s30 = int_to_ptr.vmem [resolvable:$true] %s29
      %35 = dma.hbm_to_vmem [thread:$0]  %s2, 512, %s30, [#allocation5], 256, 256, 16
    $region13: #{actor_forward.1} parent=1 // pred_fallthru
      _
    // Predicated region
    $region14: #{actor_forward.1} parent=1 // pred_check
      _
    $region15: #{actor_forward.1} parent=1 // pred_check_branch
      %37 = sbr.rel (0) target = $region17
    $region16: #{actor_forward.1} parent=1 // pred_region
      %38 = dma.done [#allocation3], 53248
    $region17: #{actor_forward.1} parent=1 // pred_fallthru
      _
    // Predicated region
    $region18: #{actor_forward.1} parent=1 // pred_check
      _
    $region19: #{actor_forward.1} parent=1 // pred_check_branch
      %40 = sbr.rel (0) target = $region21
    $region20: #{actor_forward.1} parent=1 // pred_region
      %41 = dma.done [#allocation5], 512
    $region21: #{actor_forward.1} parent=1 // pred_fallthru
      _
    %v42 = vld [vmem:[%s0] sm:$0xff]
    %v43 = vld [vmem:[%s0 + $0x8] sm:$0xff]
    %v44 = vpack.c.bf16 %v42, %v42
    %v45 = vpack.c.bf16 %v43, %v43
    %v46 = vld [vmem:[#allocation2] sm:$0xff]
    %v47 = vld [vmem:[#allocation2 + $0x8] sm:$0xff]
    %v48 = vld [vmem:[#allocation2 + $0x10] sm:$0xff]
    %v49 = vld [vmem:[#allocation2 + $0x18] sm:$0xff]
    %v50 = vld [vmem:[#allocation2 + $0x20] sm:$0xff]
    %v51 = vld [vmem:[#allocation2 + $0x28] sm:$0xff]
    %v52 = vld [vmem:[#allocation2 + $0x30] sm:$0xff]
    %v53 = vld [vmem:[#allocation2 + $0x38] sm:$0xff]
    %v54 = vld [vmem:[#allocation2 + $0x40] sm:$0xff]
    %v55 = vld [vmem:[#allocation2 + $0x48] sm:$0xff]
    %v56 = vld [vmem:[#allocation2 + $0x50] sm:$0xff]
    %v57 = vld [vmem:[#allocation2 + $0x58] sm:$0xff]
    %v58 = vld [vmem:[#allocation2 + $0x60] sm:$0xff]
    %v59 = vld [vmem:[#allocation2 + $0x68] sm:$0xff]
    %v60 = vld [vmem:[#allocation2 + $0x70] sm:$0xff]
    %v61 = vld [vmem:[#allocation2 + $0x78] sm:$0xff]
    %v62 = vld [vmem:[#allocation2 + $0x80] sm:$0xff]
    %v63 = vld [vmem:[#allocation2 + $0x88] sm:$0xff]
    %v64 = vld [vmem:[#allocation2 + $0x90] sm:$0xff]
    %v65 = vld [vmem:[#allocation2 + $0x98] sm:$0xff]
    %v66 = vld [vmem:[#allocation2 + $0xa0] sm:$0xff]
    %v67 = vld [vmem:[#allocation2 + $0xa8] sm:$0xff]
    %v68 = vld [vmem:[#allocation2 + $0xb0] sm:$0xff]
    %v69 = vld [vmem:[#allocation2 + $0xb8] sm:$0xff]
    %v70 = vld [vmem:[#allocation2 + $0xc0] sm:$0xff]
    %v71 = vld [vmem:[#allocation2 + $0xc8] sm:$0xff]
    %v72 = vld [vmem:[#allocation2 + $0xd0] sm:$0xff]
    %v73 = vld [vmem:[#allocation2 + $0xd8] sm:$0xff]
    %v74 = vld [vmem:[#allocation2 + $0xe0] sm:$0xff]
    %v75 = vld [vmem:[#allocation2 + $0xe8] sm:$0xff]
    %v76 = vld [vmem:[#allocation2 + $0xf0] sm:$0xff]
    %v77 = vld [vmem:[#allocation2 + $0xf8] sm:$0xff]
    %v78 = vld [vmem:[#allocation4] ss:$8 sm:$0x3]
    %v80 = vlaneseq
    %v81 = vshrl.u32 %v80, 7
    %v82 = vsub.s32 0, %v81
    %v83 = vrot.slane %v78, %v82
    %v84 = vlaneseq
    %v85 = vshrl.u32 %v84, 7
    %v86 = vsub.s32 1, %v85
    %v87 = vrot.slane %v78, %v86
    %v122 = vunpack.c.l.b16 %v46
    %v123 = vunpack.c.h.b16 %v46
    %v124 = vunpack.c.l.b16 %v47
    %v125 = vunpack.c.h.b16 %v47
    %v126 = vunpack.c.l.b16 %v48
    %v127 = vunpack.c.h.b16 %v48
    %v128 = vunpack.c.l.b16 %v49
    %v129 = vunpack.c.h.b16 %v49
    %v130 = vunpack.c.l.b16 %v50
    %v131 = vunpack.c.h.b16 %v50
    %v132 = vunpack.c.l.b16 %v51
    %v133 = vunpack.c.h.b16 %v51
    %v134 = vunpack.c.l.b16 %v52
    %v135 = vunpack.c.h.b16 %v52
    %v136 = vunpack.c.l.b16 %v53
    %v137 = vunpack.c.h.b16 %v53
    %v138 = vunpack.c.l.b16 %v54
    %v139 = vunpack.c.h.b16 %v54
    %v140 = vunpack.c.l.b16 %v55
    %v141 = vunpack.c.h.b16 %v55
    %v142 = vunpack.c.l.b16 %v56
    %v143 = vunpack.c.h.b16 %v56
    %v144 = vunpack.c.l.b16 %v57
    %v145 = vunpack.c.h.b16 %v57
    %v146 = vunpack.c.l.b16 %v58
    %v147 = vunpack.c.h.b16 %v58
    %v148 = vunpack.c.l.b16 %v59
    %v149 = vunpack.c.h.b16 %v59
    %v150 = vunpack.c.l.b16 %v60
    %v151 = vunpack.c.h.b16 %v60
    %v152 = vunpack.c.l.b16 %v61
    %v153 = vunpack.c.h.b16 %v61
    %v154 = vunpack.c.l.b16 %v62
    %v155 = vunpack.c.h.b16 %v62
    %v156 = vunpack.c.l.b16 %v63
    %v157 = vunpack.c.h.b16 %v63
    %v158 = vunpack.c.l.b16 %v64
    %v159 = vunpack.c.h.b16 %v64
    %v160 = vunpack.c.l.b16 %v65
    %v161 = vunpack.c.h.b16 %v65
    %v162 = vunpack.c.l.b16 %v66
    %v163 = vunpack.c.h.b16 %v66
    %v164 = vunpack.c.l.b16 %v67
    %v165 = vunpack.c.h.b16 %v67
    %v166 = vunpack.c.l.b16 %v68
    %v167 = vunpack.c.h.b16 %v68
    %v168 = vunpack.c.l.b16 %v69
    %v169 = vunpack.c.h.b16 %v69
    %v170 = vunpack.c.l.b16 %v70
    %v171 = vunpack.c.h.b16 %v70
    %v172 = vunpack.c.l.b16 %v71
    %v173 = vunpack.c.h.b16 %v71
    %v174 = vunpack.c.l.b16 %v72
    %v175 = vunpack.c.h.b16 %v72
    %v176 = vunpack.c.l.b16 %v73
    %v177 = vunpack.c.h.b16 %v73
    %v178 = vunpack.c.l.b16 %v74
    %v179 = vunpack.c.h.b16 %v74
    %v180 = vunpack.c.l.b16 %v75
    %v181 = vunpack.c.h.b16 %v75
    %v182 = vunpack.c.l.b16 %v76
    %v183 = vunpack.c.h.b16 %v76
    %v184 = vunpack.c.l.b16 %v77
    %v185 = vunpack.c.h.b16 %v77
    %v186 = vpack.c.b16 %v124, %v122
    %v187 = vpack.c.b16 %v125, %v123
    %v188 = vpack.c.b16 %v128, %v126
    %v189 = vpack.c.b16 %v129, %v127
    %v190 = vpack.c.b16 %v132, %v130
    %v191 = vpack.c.b16 %v133, %v131
    %v192 = vpack.c.b16 %v136, %v134
    %v193 = vpack.c.b16 %v137, %v135
    %v194 = vpack.c.b16 %v140, %v138
    %v195 = vpack.c.b16 %v141, %v139
    %v196 = vpack.c.b16 %v144, %v142
    %v197 = vpack.c.b16 %v145, %v143
    %v198 = vpack.c.b16 %v148, %v146
    %v199 = vpack.c.b16 %v149, %v147
    %v200 = vpack.c.b16 %v152, %v150
    %v201 = vpack.c.b16 %v153, %v151
    %v202 = vpack.c.b16 %v156, %v154
    %v203 = vpack.c.b16 %v157, %v155
    %v204 = vpack.c.b16 %v160, %v158
    %v205 = vpack.c.b16 %v161, %v159
    %v206 = vpack.c.b16 %v164, %v162
    %v207 = vpack.c.b16 %v165, %v163
    %v208 = vpack.c.b16 %v168, %v166
    %v209 = vpack.c.b16 %v169, %v167
    %v210 = vpack.c.b16 %v172, %v170
    %v211 = vpack.c.b16 %v173, %v171
    %v212 = vpack.c.b16 %v176, %v174
    %v213 = vpack.c.b16 %v177, %v175
    %v214 = vpack.c.b16 %v180, %v178
    %v215 = vpack.c.b16 %v181, %v179
    %v216 = vpack.c.b16 %v184, %v182
    %v217 = vpack.c.b16 %v185, %v183
    %250 = vmatprep.subr.bf16.mxu0 %v201
    %251 = vmatpush1.bf16.msra.mxu0 %v200
    %252 = vmatprep.subr.bf16.mxu0 %v199
    %253 = vmatpush1.bf16.msra.mxu0 %v198
    %254 = vmatprep.subr.bf16.mxu0 %v197
    %255 = vmatpush1.bf16.msra.mxu0 %v196
    %256 = vmatprep.subr.bf16.mxu0 %v195
    %257 = vmatpush1.bf16.msra.mxu0 %v194
    %258 = vmatprep.subr.bf16.mxu0 %v193
    %259 = vmatpush1.bf16.msra.mxu0 %v192
    %260 = vmatprep.subr.bf16.mxu0 %v191
    %261 = vmatpush1.bf16.msra.mxu0 %v190
    %262 = vmatprep.subr.bf16.mxu0 %v189
    %263 = vmatpush1.bf16.msra.mxu0 %v188
    %264 = vmatprep.subr.bf16.mxu0 %v187
    %265 = vmatpush1.bf16.msra.mxu0 %v186
    %266 = vmatprep.subr.bf16.mxu0 %v217
    %267 = vmatpush2.bf16.msra.mxu0 %v216
    %268 = vmatprep.subr.bf16.mxu0 %v215
    %269 = vmatpush2.bf16.msra.mxu0 %v214
    %270 = vmatprep.subr.bf16.mxu0 %v213
    %271 = vmatpush2.bf16.msra.mxu0 %v212
    %272 = vmatprep.subr.bf16.mxu0 %v211
    %273 = vmatpush2.bf16.msra.mxu0 %v210
    %274 = vmatprep.subr.bf16.mxu0 %v209
    %275 = vmatpush2.bf16.msra.mxu0 %v208
    %276 = vmatprep.subr.bf16.mxu0 %v207
    %277 = vmatpush2.bf16.msra.mxu0 %v206
    %278 = vmatprep.subr.bf16.mxu0 %v205
    %279 = vmatpush2.bf16.msra.mxu0 %v204
    %280 = vmatprep.subr.bf16.mxu0 %v203
    %281 = vmatpush2.bf16.msra.mxu0 %v202
    %282 = vmatprep.mubr.bf16.mxu0 %v45
    %283 = vmatmul.mubr.bf16.gmra.mxu0 %v44
    %v284 = vpop.f32.mrf.mxu0
    %v285 = vadd.f32 %v83, %v284
    %v286 = vpop.f32.mrf.mxu0
    %v287 = vadd.f32 %v87, %v286
    %v288 = vpop.f32.mrf.mxu0
    %v289 = vpop.f32.mrf.mxu0
    %290 = vdwg.mxu0
    %v291 = vxor.u32 %v285, 2147483648
    %v292 = vxor.u32 %v287, 2147483648
    %v293 = vmul.f32 %v291, 1.442695
    %v294 = vpow.pop %v293
    %v295 = vmul.f32 %v292, 1.442695
    %v296 = vpow.pop %v295
    %v297 = vadd.f32 %v294, 1.0
    %v298 = vadd.f32 %v296, 1.0
    %v299 = vrcp.pop %v297
    %v300 = vmul.f32 1.0, %v299
    %v301 = vrcp.pop %v298
    %v302 = vmul.f32 1.0, %v301
    %v303 = vmul.f32 %v285, %v300
    %v304 = vmul.f32 %v287, %v302
    %v305 = vpack.c.bf16 %v303, %v303
    %v306 = vpack.c.bf16 %v304, %v304
    %s307 = scalar_lea.vmem [#allocation2], 256
    %v308 = vld [vmem:[%s307] sm:$0xff]
    %v309 = vld [vmem:[%s307 + $0x8] sm:$0xff]
    %v310 = vld [vmem:[%s307 + $0x10] sm:$0xff]
    %v311 = vld [vmem:[%s307 + $0x18] sm:$0xff]
    %v312 = vld [vmem:[%s307 + $0x20] sm:$0xff]
    %v313 = vld [vmem:[%s307 + $0x28] sm:$0xff]
    %v314 = vld [vmem:[%s307 + $0x30] sm:$0xff]
    %v315 = vld [vmem:[%s307 + $0x38] sm:$0xff]
    %v316 = vld [vmem:[%s307 + $0x40] sm:$0xff]
    %v317 = vld [vmem:[%s307 + $0x48] sm:$0xff]
    %v318 = vld [vmem:[%s307 + $0x50] sm:$0xff]
    %v319 = vld [vmem:[%s307 + $0x58] sm:$0xff]
    %v320 = vld [vmem:[%s307 + $0x60] sm:$0xff]
    %v321 = vld [vmem:[%s307 + $0x68] sm:$0xff]
    %v322 = vld [vmem:[%s307 + $0x70] sm:$0xff]
    %v323 = vld [vmem:[%s307 + $0x78] sm:$0xff]
    %v324 = vld [vmem:[%s307 + $0x80] sm:$0xff]
    %v325 = vld [vmem:[%s307 + $0x88] sm:$0xff]
    %v326 = vld [vmem:[%s307 + $0x90] sm:$0xff]
    %v327 = vld [vmem:[%s307 + $0x98] sm:$0xff]
    %v328 = vld [vmem:[%s307 + $0xa0] sm:$0xff]
    %v329 = vld [vmem:[%s307 + $0xa8] sm:$0xff]
    %v330 = vld [vmem:[%s307 + $0xb0] sm:$0xff]
    %v331 = vld [vmem:[%s307 + $0xb8] sm:$0xff]
    %v332 = vld [vmem:[%s307 + $0xc0] sm:$0xff]
    %v333 = vld [vmem:[%s307 + $0xc8] sm:$0xff]
    %v334 = vld [vmem:[%s307 + $0xd0] sm:$0xff]
    %v335 = vld [vmem:[%s307 + $0xd8] sm:$0xff]
    %v336 = vld [vmem:[%s307 + $0xe0] sm:$0xff]
    %v337 = vld [vmem:[%s307 + $0xe8] sm:$0xff]
    %v338 = vld [vmem:[%s307 + $0xf0] sm:$0xff]
    %v339 = vld [vmem:[%s307 + $0xf8] sm:$0xff]
    %s340 = scalar_lea.vmem [#allocation4], 1
    %v341 = vld [vmem:[%s340] ss:$8 sm:$0x3]
    %v343 = vlaneseq
    %v344 = vshrl.u32 %v343, 7
    %v345 = vsub.s32 0, %v344
    %v346 = vrot.slane %v341, %v345
    %v347 = vlaneseq
    %v348 = vshrl.u32 %v347, 7
    %v349 = vsub.s32 1, %v348
    %v350 = vrot.slane %v341, %v349
    %v385 = vunpack.c.l.b16 %v308
    %v386 = vunpack.c.h.b16 %v308
    %v387 = vunpack.c.l.b16 %v309
    %v388 = vunpack.c.h.b16 %v309
    %v389 = vunpack.c.l.b16 %v310
    %v390 = vunpack.c.h.b16 %v310
    %v391 = vunpack.c.l.b16 %v311
    %v392 = vunpack.c.h.b16 %v311
    %v393 = vunpack.c.l.b16 %v312
    %v394 = vunpack.c.h.b16 %v312
    %v395 = vunpack.c.l.b16 %v313
    %v396 = vunpack.c.h.b16 %v313
    %v397 = vunpack.c.l.b16 %v314
    %v398 = vunpack.c.h.b16 %v314
    %v399 = vunpack.c.l.b16 %v315
    %v400 = vunpack.c.h.b16 %v315
    %v401 = vunpack.c.l.b16 %v316
    %v402 = vunpack.c.h.b16 %v316
    %v403 = vunpack.c.l.b16 %v317
    %v404 = vunpack.c.h.b16 %v317
    %v405 = vunpack.c.l.b16 %v318
    %v406 = vunpack.c.h.b16 %v318
    %v407 = vunpack.c.l.b16 %v319
    %v408 = vunpack.c.h.b16 %v319
    %v409 = vunpack.c.l.b16 %v320
    %v410 = vunpack.c.h.b16 %v320
    %v411 = vunpack.c.l.b16 %v321
    %v412 = vunpack.c.h.b16 %v321
    %v413 = vunpack.c.l.b16 %v322
    %v414 = vunpack.c.h.b16 %v322
    %v415 = vunpack.c.l.b16 %v323
    %v416 = vunpack.c.h.b16 %v323
    %v417 = vunpack.c.l.b16 %v324
    %v418 = vunpack.c.h.b16 %v324
    %v419 = vunpack.c.l.b16 %v325
    %v420 = vunpack.c.h.b16 %v325
    %v421 = vunpack.c.l.b16 %v326
    %v422 = vunpack.c.h.b16 %v326
    %v423 = vunpack.c.l.b16 %v327
    %v424 = vunpack.c.h.b16 %v327
    %v425 = vunpack.c.l.b16 %v328
    %v426 = vunpack.c.h.b16 %v328
    %v427 = vunpack.c.l.b16 %v329
    %v428 = vunpack.c.h.b16 %v329
    %v429 = vunpack.c.l.b16 %v330
    %v430 = vunpack.c.h.b16 %v330
    %v431 = vunpack.c.l.b16 %v331
    %v432 = vunpack.c.h.b16 %v331
    %v433 = vunpack.c.l.b16 %v332
    %v434 = vunpack.c.h.b16 %v332
    %v435 = vunpack.c.l.b16 %v333
    %v436 = vunpack.c.h.b16 %v333
    %v437 = vunpack.c.l.b16 %v334
    %v438 = vunpack.c.h.b16 %v334
    %v439 = vunpack.c.l.b16 %v335
    %v440 = vunpack.c.h.b16 %v335
    %v441 = vunpack.c.l.b16 %v336
    %v442 = vunpack.c.h.b16 %v336
    %v443 = vunpack.c.l.b16 %v337
    %v444 = vunpack.c.h.b16 %v337
    %v445 = vunpack.c.l.b16 %v338
    %v446 = vunpack.c.h.b16 %v338
    %v447 = vunpack.c.l.b16 %v339
    %v448 = vunpack.c.h.b16 %v339
    %v449 = vpack.c.b16 %v387, %v385
    %v450 = vpack.c.b16 %v388, %v386
    %v451 = vpack.c.b16 %v391, %v389
    %v452 = vpack.c.b16 %v392, %v390
    %v453 = vpack.c.b16 %v395, %v393
    %v454 = vpack.c.b16 %v396, %v394
    %v455 = vpack.c.b16 %v399, %v397
    %v456 = vpack.c.b16 %v400, %v398
    %v457 = vpack.c.b16 %v403, %v401
    %v458 = vpack.c.b16 %v404, %v402
    %v459 = vpack.c.b16 %v407, %v405
    %v460 = vpack.c.b16 %v408, %v406
    %v461 = vpack.c.b16 %v411, %v409
    %v462 = vpack.c.b16 %v412, %v410
    %v463 = vpack.c.b16 %v415, %v413
    %v464 = vpack.c.b16 %v416, %v414
    %v465 = vpack.c.b16 %v419, %v417
    %v466 = vpack.c.b16 %v420, %v418
    %v467 = vpack.c.b16 %v423, %v421
    %v468 = vpack.c.b16 %v424, %v422
    %v469 = vpack.c.b16 %v427, %v425
    %v470 = vpack.c.b16 %v428, %v426
    %v471 = vpack.c.b16 %v431, %v429
    %v472 = vpack.c.b16 %v432, %v430
    %v473 = vpack.c.b16 %v435, %v433
    %v474 = vpack.c.b16 %v436, %v434
    %v475 = vpack.c.b16 %v439, %v437
    %v476 = vpack.c.b16 %v440, %v438
    %v477 = vpack.c.b16 %v443, %v441
    %v478 = vpack.c.b16 %v444, %v442
    %v479 = vpack.c.b16 %v447, %v445
    %v480 = vpack.c.b16 %v448, %v446
    %513 = vmatprep.subr.bf16.mxu0 %v464
    %514 = vmatpush1.bf16.msra.mxu0 %v463
    %515 = vmatprep.subr.bf16.mxu0 %v462
    %516 = vmatpush1.bf16.msra.mxu0 %v461
    %517 = vmatprep.subr.bf16.mxu0 %v460
    %518 = vmatpush1.bf16.msra.mxu0 %v459
    %519 = vmatprep.subr.bf16.mxu0 %v458
    %520 = vmatpush1.bf16.msra.mxu0 %v457
    %521 = vmatprep.subr.bf16.mxu0 %v456
    %522 = vmatpush1.bf16.msra.mxu0 %v455
    %523 = vmatprep.subr.bf16.mxu0 %v454
    %524 = vmatpush1.bf16.msra.mxu0 %v453
    %525 = vmatprep.subr.bf16.mxu0 %v452
    %526 = vmatpush1.bf16.msra.mxu0 %v451
    %527 = vmatprep.subr.bf16.mxu0 %v450
    %528 = vmatpush1.bf16.msra.mxu0 %v449
    %529 = vmatprep.subr.bf16.mxu0 %v480
    %530 = vmatpush2.bf16.msra.mxu0 %v479
    %531 = vmatprep.subr.bf16.mxu0 %v478
    %532 = vmatpush2.bf16.msra.mxu0 %v477
    %533 = vmatprep.subr.bf16.mxu0 %v476
    %534 = vmatpush2.bf16.msra.mxu0 %v475
    %535 = vmatprep.subr.bf16.mxu0 %v474
    %536 = vmatpush2.bf16.msra.mxu0 %v473
    %537 = vmatprep.subr.bf16.mxu0 %v472
    %538 = vmatpush2.bf16.msra.mxu0 %v471
    %539 = vmatprep.subr.bf16.mxu0 %v470
    %540 = vmatpush2.bf16.msra.mxu0 %v469
    %541 = vmatprep.subr.bf16.mxu0 %v468
    %542 = vmatpush2.bf16.msra.mxu0 %v467
    %543 = vmatprep.subr.bf16.mxu0 %v466
    %544 = vmatpush2.bf16.msra.mxu0 %v465
    %545 = vmatprep.mubr.bf16.mxu0 %v306
    %546 = vmatmul.mubr.bf16.gmra.mxu0 %v305
    %v547 = vpop.f32.mrf.mxu0
    %v548 = vadd.f32 %v346, %v547
    %v549 = vpop.f32.mrf.mxu0
    %v550 = vadd.f32 %v350, %v549
    %v551 = vpop.f32.mrf.mxu0
    %v552 = vpop.f32.mrf.mxu0
    %553 = vdwg.mxu0
    %v554 = vmax.f32 %v548, 0.0
    %v555 = vmax.f32 %v550, 0.0
    %v556 = vpack.c.bf16 %v554, %v554
    %v557 = vpack.c.bf16 %v555, %v555
    %s558 = scalar_lea.vmem [#allocation2], 512
    %v559 = vld [vmem:[%s558] sm:$0xff]
    %v560 = vld [vmem:[%s558 + $0x8] sm:$0xff]
    %v561 = vld [vmem:[%s558 + $0x10] sm:$0xff]
    %v562 = vld [vmem:[%s558 + $0x18] sm:$0xff]
    %v563 = vld [vmem:[%s558 + $0x20] sm:$0xff]
    %v564 = vld [vmem:[%s558 + $0x28] sm:$0xff]
    %v565 = vld [vmem:[%s558 + $0x30] sm:$0xff]
    %v566 = vld [vmem:[%s558 + $0x38] sm:$0xff]
    %v567 = vld [vmem:[%s558 + $0x40] sm:$0xff]
    %v568 = vld [vmem:[%s558 + $0x48] sm:$0xff]
    %v569 = vld [vmem:[%s558 + $0x50] sm:$0xff]
    %v570 = vld [vmem:[%s558 + $0x58] sm:$0xff]
    %v571 = vld [vmem:[%s558 + $0x60] sm:$0xff]
    %v572 = vld [vmem:[%s558 + $0x68] sm:$0xff]
    %v573 = vld [vmem:[%s558 + $0x70] sm:$0xff]
    %v574 = vld [vmem:[%s558 + $0x78] sm:$0xff]
    %v575 = vld [vmem:[%s558 + $0x80] sm:$0xff]
    %v576 = vld [vmem:[%s558 + $0x88] sm:$0xff]
    %v577 = vld [vmem:[%s558 + $0x90] sm:$0xff]
    %v578 = vld [vmem:[%s558 + $0x98] sm:$0xff]
    %v579 = vld [vmem:[%s558 + $0xa0] sm:$0xff]
    %v580 = vld [vmem:[%s558 + $0xa8] sm:$0xff]
    %v581 = vld [vmem:[%s558 + $0xb0] sm:$0xff]
    %v582 = vld [vmem:[%s558 + $0xb8] sm:$0xff]
    %v583 = vld [vmem:[%s558 + $0xc0] sm:$0xff]
    %v584 = vld [vmem:[%s558 + $0xc8] sm:$0xff]
    %v585 = vld [vmem:[%s558 + $0xd0] sm:$0xff]
    %v586 = vld [vmem:[%s558 + $0xd8] sm:$0xff]
    %v587 = vld [vmem:[%s558 + $0xe0] sm:$0xff]
    %v588 = vld [vmem:[%s558 + $0xe8] sm:$0xff]
    %v589 = vld [vmem:[%s558 + $0xf0] sm:$0xff]
    %v590 = vld [vmem:[%s558 + $0xf8] sm:$0xff]
    %s591 = scalar_lea.vmem [#allocation4], 2
    %v592 = vld [vmem:[%s591] ss:$8 sm:$0x3]
    %v594 = vlaneseq
    %v595 = vshrl.u32 %v594, 7
    %v596 = vsub.s32 0, %v595
    %v597 = vrot.slane %v592, %v596
    %v598 = vlaneseq
    %v599 = vshrl.u32 %v598, 7
    %v600 = vsub.s32 1, %v599
    %v601 = vrot.slane %v592, %v600
    %v636 = vunpack.c.l.b16 %v559
    %v637 = vunpack.c.h.b16 %v559
    %v638 = vunpack.c.l.b16 %v560
    %v639 = vunpack.c.h.b16 %v560
    %v640 = vunpack.c.l.b16 %v561
    %v641 = vunpack.c.h.b16 %v561
    %v642 = vunpack.c.l.b16 %v562
    %v643 = vunpack.c.h.b16 %v562
    %v644 = vunpack.c.l.b16 %v563
    %v645 = vunpack.c.h.b16 %v563
    %v646 = vunpack.c.l.b16 %v564
    %v647 = vunpack.c.h.b16 %v564
    %v648 = vunpack.c.l.b16 %v565
    %v649 = vunpack.c.h.b16 %v565
    %v650 = vunpack.c.l.b16 %v566
    %v651 = vunpack.c.h.b16 %v566
    %v652 = vunpack.c.l.b16 %v567
    %v653 = vunpack.c.h.b16 %v567
    %v654 = vunpack.c.l.b16 %v568
    %v655 = vunpack.c.h.b16 %v568
    %v656 = vunpack.c.l.b16 %v569
    %v657 = vunpack.c.h.b16 %v569
    %v658 = vunpack.c.l.b16 %v570
    %v659 = vunpack.c.h.b16 %v570
    %v660 = vunpack.c.l.b16 %v571
    %v661 = vunpack.c.h.b16 %v571
    %v662 = vunpack.c.l.b16 %v572
    %v663 = vunpack.c.h.b16 %v572
    %v664 = vunpack.c.l.b16 %v573
    %v665 = vunpack.c.h.b16 %v573
    %v666 = vunpack.c.l.b16 %v574
    %v667 = vunpack.c.h.b16 %v574
    %v668 = vunpack.c.l.b16 %v575
    %v669 = vunpack.c.h.b16 %v575
    %v670 = vunpack.c.l.b16 %v576
    %v671 = vunpack.c.h.b16 %v576
    %v672 = vunpack.c.l.b16 %v577
    %v673 = vunpack.c.h.b16 %v577
    %v674 = vunpack.c.l.b16 %v578
    %v675 = vunpack.c.h.b16 %v578
    %v676 = vunpack.c.l.b16 %v579
    %v677 = vunpack.c.h.b16 %v579
    %v678 = vunpack.c.l.b16 %v580
    %v679 = vunpack.c.h.b16 %v580
    %v680 = vunpack.c.l.b16 %v581
    %v681 = vunpack.c.h.b16 %v581
    %v682 = vunpack.c.l.b16 %v582
    %v683 = vunpack.c.h.b16 %v582
    %v684 = vunpack.c.l.b16 %v583
    %v685 = vunpack.c.h.b16 %v583
    %v686 = vunpack.c.l.b16 %v584
    %v687 = vunpack.c.h.b16 %v584
    %v688 = vunpack.c.l.b16 %v585
    %v689 = vunpack.c.h.b16 %v585
    %v690 = vunpack.c.l.b16 %v586
    %v691 = vunpack.c.h.b16 %v586
    %v692 = vunpack.c.l.b16 %v587
    %v693 = vunpack.c.h.b16 %v587
    %v694 = vunpack.c.l.b16 %v588
    %v695 = vunpack.c.h.b16 %v588
    %v696 = vunpack.c.l.b16 %v589
    %v697 = vunpack.c.h.b16 %v589
    %v698 = vunpack.c.l.b16 %v590
    %v699 = vunpack.c.h.b16 %v590
    %v700 = vpack.c.b16 %v638, %v636
    %v701 = vpack.c.b16 %v639, %v637
    %v702 = vpack.c.b16 %v642, %v640
    %v703 = vpack.c.b16 %v643, %v641
    %v704 = vpack.c.b16 %v646, %v644
    %v705 = vpack.c.b16 %v647, %v645
    %v706 = vpack.c.b16 %v650, %v648
    %v707 = vpack.c.b16 %v651, %v649
    %v708 = vpack.c.b16 %v654, %v652
    %v709 = vpack.c.b16 %v655, %v653
    %v710 = vpack.c.b16 %v658, %v656
    %v711 = vpack.c.b16 %v659, %v657
    %v712 = vpack.c.b16 %v662, %v660
    %v713 = vpack.c.b16 %v663, %v661
    %v714 = vpack.c.b16 %v666, %v664
    %v715 = vpack.c.b16 %v667, %v665
    %v716 = vpack.c.b16 %v670, %v668
    %v717 = vpack.c.b16 %v671, %v669
    %v718 = vpack.c.b16 %v674, %v672
    %v719 = vpack.c.b16 %v675, %v673
    %v720 = vpack.c.b16 %v678, %v676
    %v721 = vpack.c.b16 %v679, %v677
    %v722 = vpack.c.b16 %v682, %v680
    %v723 = vpack.c.b16 %v683, %v681
    %v724 = vpack.c.b16 %v686, %v684
    %v725 = vpack.c.b16 %v687, %v685
    %v726 = vpack.c.b16 %v690, %v688
    %v727 = vpack.c.b16 %v691, %v689
    %v728 = vpack.c.b16 %v694, %v692
    %v729 = vpack.c.b16 %v695, %v693
    %v730 = vpack.c.b16 %v698, %v696
    %v731 = vpack.c.b16 %v699, %v697
    %764 = vmatprep.subr.bf16.mxu0 %v715
    %765 = vmatpush1.bf16.msra.mxu0 %v714
    %766 = vmatprep.subr.bf16.mxu0 %v713
    %767 = vmatpush1.bf16.msra.mxu0 %v712
    %768 = vmatprep.subr.bf16.mxu0 %v711
    %769 = vmatpush1.bf16.msra.mxu0 %v710
    %770 = vmatprep.subr.bf16.mxu0 %v709
    %771 = vmatpush1.bf16.msra.mxu0 %v708
    %772 = vmatprep.subr.bf16.mxu0 %v707
    %773 = vmatpush1.bf16.msra.mxu0 %v706
    %774 = vmatprep.subr.bf16.mxu0 %v705
    %775 = vmatpush1.bf16.msra.mxu0 %v704
    %776 = vmatprep.subr.bf16.mxu0 %v703
    %777 = vmatpush1.bf16.msra.mxu0 %v702
    %778 = vmatprep.subr.bf16.mxu0 %v701
    %779 = vmatpush1.bf16.msra.mxu0 %v700
    %780 = vmatprep.subr.bf16.mxu0 %v731
    %781 = vmatpush2.bf16.msra.mxu0 %v730
    %782 = vmatprep.subr.bf16.mxu0 %v729
    %783 = vmatpush2.bf16.msra.mxu0 %v728
    %784 = vmatprep.subr.bf16.mxu0 %v727
    %785 = vmatpush2.bf16.msra.mxu0 %v726
    %786 = vmatprep.subr.bf16.mxu0 %v725
    %787 = vmatpush2.bf16.msra.mxu0 %v724
    %788 = vmatprep.subr.bf16.mxu0 %v723
    %789 = vmatpush2.bf16.msra.mxu0 %v722
    %790 = vmatprep.subr.bf16.mxu0 %v721
    %791 = vmatpush2.bf16.msra.mxu0 %v720
    %792 = vmatprep.subr.bf16.mxu0 %v719
    %793 = vmatpush2.bf16.msra.mxu0 %v718
    %794 = vmatprep.subr.bf16.mxu0 %v717
    %795 = vmatpush2.bf16.msra.mxu0 %v716
    %796 = vmatprep.mubr.bf16.mxu0 %v557
    %797 = vmatmul.mubr.bf16.gmra.mxu0 %v556
    %v798 = vpop.f32.mrf.mxu0
    %v799 = vadd.f32 %v597, %v798
    %v800 = vpop.f32.mrf.mxu0
    %v801 = vadd.f32 %v601, %v800
    %v802 = vpop.f32.mrf.mxu0
    %v803 = vpop.f32.mrf.mxu0
    %804 = vdwg.mxu0
    %v805 = vmax.f32 %v799, 0.0
    %v806 = vmax.f32 %v801, 0.0
    %v807 = vpack.c.bf16 %v805, %v805
    %v808 = vpack.c.bf16 %v806, %v806
    %s809 = scalar_lea.vmem [#allocation2], 768
    %v810 = vld [vmem:[%s809] sm:$0xff]
    %v811 = vld [vmem:[%s809 + $0x8] sm:$0xff]
    %v812 = vld [vmem:[%s809 + $0x10] sm:$0xff]
    %v813 = vld [vmem:[%s809 + $0x18] sm:$0xff]
    %v814 = vld [vmem:[%s809 + $0x20] sm:$0xff]
    %v815 = vld [vmem:[%s809 + $0x28] sm:$0xff]
    %v816 = vld [vmem:[%s809 + $0x30] sm:$0xff]
    %v817 = vld [vmem:[%s809 + $0x38] sm:$0xff]
    %v818 = vld [vmem:[%s809 + $0x40] sm:$0xff]
    %v819 = vld [vmem:[%s809 + $0x48] sm:$0xff]
    %v820 = vld [vmem:[%s809 + $0x50] sm:$0xff]
    %v821 = vld [vmem:[%s809 + $0x58] sm:$0xff]
    %v822 = vld [vmem:[%s809 + $0x60] sm:$0xff]
    %v823 = vld [vmem:[%s809 + $0x68] sm:$0xff]
    %v824 = vld [vmem:[%s809 + $0x70] sm:$0xff]
    %v825 = vld [vmem:[%s809 + $0x78] sm:$0xff]
    %v826 = vld [vmem:[%s809 + $0x80] sm:$0xff]
    %v827 = vld [vmem:[%s809 + $0x88] sm:$0xff]
    %v828 = vld [vmem:[%s809 + $0x90] sm:$0xff]
    %v829 = vld [vmem:[%s809 + $0x98] sm:$0xff]
    %v830 = vld [vmem:[%s809 + $0xa0] sm:$0xff]
    %v831 = vld [vmem:[%s809 + $0xa8] sm:$0xff]
    %v832 = vld [vmem:[%s809 + $0xb0] sm:$0xff]
    %v833 = vld [vmem:[%s809 + $0xb8] sm:$0xff]
    %v834 = vld [vmem:[%s809 + $0xc0] sm:$0xff]
    %v835 = vld [vmem:[%s809 + $0xc8] sm:$0xff]
    %v836 = vld [vmem:[%s809 + $0xd0] sm:$0xff]
    %v837 = vld [vmem:[%s809 + $0xd8] sm:$0xff]
    %v838 = vld [vmem:[%s809 + $0xe0] sm:$0xff]
    %v839 = vld [vmem:[%s809 + $0xe8] sm:$0xff]
    %v840 = vld [vmem:[%s809 + $0xf0] sm:$0xff]
    %v841 = vld [vmem:[%s809 + $0xf8] sm:$0xff]
    %s842 = scalar_lea.vmem [#allocation4], 3
    %v843 = vld [vmem:[%s842] ss:$8 sm:$0x3]
    %v845 = vlaneseq
    %v846 = vshrl.u32 %v845, 7
    %v847 = vsub.s32 0, %v846
    %v848 = vrot.slane %v843, %v847
    %v849 = vlaneseq
    %v850 = vshrl.u32 %v849, 7
    %v851 = vsub.s32 1, %v850
    %v852 = vrot.slane %v843, %v851
    %v887 = vunpack.c.l.b16 %v810
    %v888 = vunpack.c.h.b16 %v810
    %v889 = vunpack.c.l.b16 %v811
    %v890 = vunpack.c.h.b16 %v811
    %v891 = vunpack.c.l.b16 %v812
    %v892 = vunpack.c.h.b16 %v812
    %v893 = vunpack.c.l.b16 %v813
    %v894 = vunpack.c.h.b16 %v813
    %v895 = vunpack.c.l.b16 %v814
    %v896 = vunpack.c.h.b16 %v814
    %v897 = vunpack.c.l.b16 %v815
    %v898 = vunpack.c.h.b16 %v815
    %v899 = vunpack.c.l.b16 %v816
    %v900 = vunpack.c.h.b16 %v816
    %v901 = vunpack.c.l.b16 %v817
    %v902 = vunpack.c.h.b16 %v817
    %v903 = vunpack.c.l.b16 %v818
    %v904 = vunpack.c.h.b16 %v818
    %v905 = vunpack.c.l.b16 %v819
    %v906 = vunpack.c.h.b16 %v819
    %v907 = vunpack.c.l.b16 %v820
    %v908 = vunpack.c.h.b16 %v820
    %v909 = vunpack.c.l.b16 %v821
    %v910 = vunpack.c.h.b16 %v821
    %v911 = vunpack.c.l.b16 %v822
    %v912 = vunpack.c.h.b16 %v822
    %v913 = vunpack.c.l.b16 %v823
    %v914 = vunpack.c.h.b16 %v823
    %v915 = vunpack.c.l.b16 %v824
    %v916 = vunpack.c.h.b16 %v824
    %v917 = vunpack.c.l.b16 %v825
    %v918 = vunpack.c.h.b16 %v825
    %v919 = vunpack.c.l.b16 %v826
    %v920 = vunpack.c.h.b16 %v826
    %v921 = vunpack.c.l.b16 %v827
    %v922 = vunpack.c.h.b16 %v827
    %v923 = vunpack.c.l.b16 %v828
    %v924 = vunpack.c.h.b16 %v828
    %v925 = vunpack.c.l.b16 %v829
    %v926 = vunpack.c.h.b16 %v829
    %v927 = vunpack.c.l.b16 %v830
    %v928 = vunpack.c.h.b16 %v830
    %v929 = vunpack.c.l.b16 %v831
    %v930 = vunpack.c.h.b16 %v831
    %v931 = vunpack.c.l.b16 %v832
    %v932 = vunpack.c.h.b16 %v832
    %v933 = vunpack.c.l.b16 %v833
    %v934 = vunpack.c.h.b16 %v833
    %v935 = vunpack.c.l.b16 %v834
    %v936 = vunpack.c.h.b16 %v834
    %v937 = vunpack.c.l.b16 %v835
    %v938 = vunpack.c.h.b16 %v835
    %v939 = vunpack.c.l.b16 %v836
    %v940 = vunpack.c.h.b16 %v836
    %v941 = vunpack.c.l.b16 %v837
    %v942 = vunpack.c.h.b16 %v837
    %v943 = vunpack.c.l.b16 %v838
    %v944 = vunpack.c.h.b16 %v838
    %v945 = vunpack.c.l.b16 %v839
    %v946 = vunpack.c.h.b16 %v839
    %v947 = vunpack.c.l.b16 %v840
    %v948 = vunpack.c.h.b16 %v840
    %v949 = vunpack.c.l.b16 %v841
    %v950 = vunpack.c.h.b16 %v841
    %v951 = vpack.c.b16 %v889, %v887
    %v952 = vpack.c.b16 %v890, %v888
    %v953 = vpack.c.b16 %v893, %v891
    %v954 = vpack.c.b16 %v894, %v892
    %v955 = vpack.c.b16 %v897, %v895
    %v956 = vpack.c.b16 %v898, %v896
    %v957 = vpack.c.b16 %v901, %v899
    %v958 = vpack.c.b16 %v902, %v900
    %v959 = vpack.c.b16 %v905, %v903
    %v960 = vpack.c.b16 %v906, %v904
    %v961 = vpack.c.b16 %v909, %v907
    %v962 = vpack.c.b16 %v910, %v908
    %v963 = vpack.c.b16 %v913, %v911
    %v964 = vpack.c.b16 %v914, %v912
    %v965 = vpack.c.b16 %v917, %v915
    %v966 = vpack.c.b16 %v918, %v916
    %v967 = vpack.c.b16 %v921, %v919
    %v968 = vpack.c.b16 %v922, %v920
    %v969 = vpack.c.b16 %v925, %v923
    %v970 = vpack.c.b16 %v926, %v924
    %v971 = vpack.c.b16 %v929, %v927
    %v972 = vpack.c.b16 %v930, %v928
    %v973 = vpack.c.b16 %v933, %v931
    %v974 = vpack.c.b16 %v934, %v932
    %v975 = vpack.c.b16 %v937, %v935
    %v976 = vpack.c.b16 %v938, %v936
    %v977 = vpack.c.b16 %v941, %v939
    %v978 = vpack.c.b16 %v942, %v940
    %v979 = vpack.c.b16 %v945, %v943
    %v980 = vpack.c.b16 %v946, %v944
    %v981 = vpack.c.b16 %v949, %v947
    %v982 = vpack.c.b16 %v950, %v948
    %1015 = vmatprep.subr.bf16.mxu0 %v966
    %1016 = vmatpush1.bf16.msra.mxu0 %v965
    %1017 = vmatprep.subr.bf16.mxu0 %v964
    %1018 = vmatpush1.bf16.msra.mxu0 %v963
    %1019 = vmatprep.subr.bf16.mxu0 %v962
    %1020 = vmatpush1.bf16.msra.mxu0 %v961
    %1021 = vmatprep.subr.bf16.mxu0 %v960
    %1022 = vmatpush1.bf16.msra.mxu0 %v959
    %1023 = vmatprep.subr.bf16.mxu0 %v958
    %1024 = vmatpush1.bf16.msra.mxu0 %v957
    %1025 = vmatprep.subr.bf16.mxu0 %v956
    %1026 = vmatpush1.bf16.msra.mxu0 %v955
    %1027 = vmatprep.subr.bf16.mxu0 %v954
    %1028 = vmatpush1.bf16.msra.mxu0 %v953
    %1029 = vmatprep.subr.bf16.mxu0 %v952
    %1030 = vmatpush1.bf16.msra.mxu0 %v951
    %1031 = vmatprep.subr.bf16.mxu0 %v982
    %1032 = vmatpush2.bf16.msra.mxu0 %v981
    %1033 = vmatprep.subr.bf16.mxu0 %v980
    %1034 = vmatpush2.bf16.msra.mxu0 %v979
    %1035 = vmatprep.subr.bf16.mxu0 %v978
    %1036 = vmatpush2.bf16.msra.mxu0 %v977
    %1037 = vmatprep.subr.bf16.mxu0 %v976
    %1038 = vmatpush2.bf16.msra.mxu0 %v975
    %1039 = vmatprep.subr.bf16.mxu0 %v974
    %1040 = vmatpush2.bf16.msra.mxu0 %v973
    %1041 = vmatprep.subr.bf16.mxu0 %v972
    %1042 = vmatpush2.bf16.msra.mxu0 %v971
    %1043 = vmatprep.subr.bf16.mxu0 %v970
    %1044 = vmatpush2.bf16.msra.mxu0 %v969
    %1045 = vmatprep.subr.bf16.mxu0 %v968
    %1046 = vmatpush2.bf16.msra.mxu0 %v967
    %1047 = vmatprep.mubr.bf16.mxu0 %v808
    %1048 = vmatmul.mubr.bf16.gmra.mxu0 %v807
    %v1049 = vpop.f32.mrf.mxu0
    %v1050 = vadd.f32 %v848, %v1049
    %v1051 = vpop.f32.mrf.mxu0
    %v1052 = vadd.f32 %v852, %v1051
    %v1053 = vpop.f32.mrf.mxu0
    %v1054 = vpop.f32.mrf.mxu0
    %1055 = vdwg.mxu0
    %v1056 = vadd.f32 %v303, %v1050
    %v1057 = vadd.f32 %v304, %v1052
    %v1058 = vpack.c.bf16 %v1056, %v1056
    %v1059 = vpack.c.bf16 %v1057, %v1057
    %s1060 = scalar_lea.vmem [#allocation2], 1024
    %v1061 = vld [vmem:[%s1060] sm:$0xff]
    %v1062 = vld [vmem:[%s1060 + $0x8] sm:$0xff]
    %v1063 = vld [vmem:[%s1060 + $0x10] sm:$0xff]
    %v1064 = vld [vmem:[%s1060 + $0x18] sm:$0xff]
    %v1065 = vld [vmem:[%s1060 + $0x20] sm:$0xff]
    %v1066 = vld [vmem:[%s1060 + $0x28] sm:$0xff]
    %v1067 = vld [vmem:[%s1060 + $0x30] sm:$0xff]
    %v1068 = vld [vmem:[%s1060 + $0x38] sm:$0xff]
    %v1069 = vld [vmem:[%s1060 + $0x40] sm:$0xff]
    %v1070 = vld [vmem:[%s1060 + $0x48] sm:$0xff]
    %v1071 = vld [vmem:[%s1060 + $0x50] sm:$0xff]
    %v1072 = vld [vmem:[%s1060 + $0x58] sm:$0xff]
    %v1073 = vld [vmem:[%s1060 + $0x60] sm:$0xff]
    %v1074 = vld [vmem:[%s1060 + $0x68] sm:$0xff]
    %v1075 = vld [vmem:[%s1060 + $0x70] sm:$0xff]
    %v1076 = vld [vmem:[%s1060 + $0x78] sm:$0xff]
    %v1077 = vld [vmem:[%s1060 + $0x80] sm:$0xff]
    %v1078 = vld [vmem:[%s1060 + $0x88] sm:$0xff]
    %v1079 = vld [vmem:[%s1060 + $0x90] sm:$0xff]
    %v1080 = vld [vmem:[%s1060 + $0x98] sm:$0xff]
    %v1081 = vld [vmem:[%s1060 + $0xa0] sm:$0xff]
    %v1082 = vld [vmem:[%s1060 + $0xa8] sm:$0xff]
    %v1083 = vld [vmem:[%s1060 + $0xb0] sm:$0xff]
    %v1084 = vld [vmem:[%s1060 + $0xb8] sm:$0xff]
    %v1085 = vld [vmem:[%s1060 + $0xc0] sm:$0xff]
    %v1086 = vld [vmem:[%s1060 + $0xc8] sm:$0xff]
    %v1087 = vld [vmem:[%s1060 + $0xd0] sm:$0xff]
    %v1088 = vld [vmem:[%s1060 + $0xd8] sm:$0xff]
    %v1089 = vld [vmem:[%s1060 + $0xe0] sm:$0xff]
    %v1090 = vld [vmem:[%s1060 + $0xe8] sm:$0xff]
    %v1091 = vld [vmem:[%s1060 + $0xf0] sm:$0xff]
    %v1092 = vld [vmem:[%s1060 + $0xf8] sm:$0xff]
    %s1093 = scalar_lea.vmem [#allocation4], 4
    %v1094 = vld [vmem:[%s1093] ss:$8 sm:$0x3]
    %v1096 = vlaneseq
    %v1097 = vshrl.u32 %v1096, 7
    %v1098 = vsub.s32 0, %v1097
    %v1099 = vrot.slane %v1094, %v1098
    %v1100 = vlaneseq
    %v1101 = vshrl.u32 %v1100, 7
    %v1102 = vsub.s32 1, %v1101
    %v1103 = vrot.slane %v1094, %v1102
    %v1138 = vunpack.c.l.b16 %v1061
    %v1139 = vunpack.c.h.b16 %v1061
    %v1140 = vunpack.c.l.b16 %v1062
    %v1141 = vunpack.c.h.b16 %v1062
    %v1142 = vunpack.c.l.b16 %v1063
    %v1143 = vunpack.c.h.b16 %v1063
    %v1144 = vunpack.c.l.b16 %v1064
    %v1145 = vunpack.c.h.b16 %v1064
    %v1146 = vunpack.c.l.b16 %v1065
    %v1147 = vunpack.c.h.b16 %v1065
    %v1148 = vunpack.c.l.b16 %v1066
    %v1149 = vunpack.c.h.b16 %v1066
    %v1150 = vunpack.c.l.b16 %v1067
    %v1151 = vunpack.c.h.b16 %v1067
    %v1152 = vunpack.c.l.b16 %v1068
    %v1153 = vunpack.c.h.b16 %v1068
    %v1154 = vunpack.c.l.b16 %v1069
    %v1155 = vunpack.c.h.b16 %v1069
    %v1156 = vunpack.c.l.b16 %v1070
    %v1157 = vunpack.c.h.b16 %v1070
    %v1158 = vunpack.c.l.b16 %v1071
    %v1159 = vunpack.c.h.b16 %v1071
    %v1160 = vunpack.c.l.b16 %v1072
    %v1161 = vunpack.c.h.b16 %v1072
    %v1162 = vunpack.c.l.b16 %v1073
    %v1163 = vunpack.c.h.b16 %v1073
    %v1164 = vunpack.c.l.b16 %v1074
    %v1165 = vunpack.c.h.b16 %v1074
    %v1166 = vunpack.c.l.b16 %v1075
    %v1167 = vunpack.c.h.b16 %v1075
    %v1168 = vunpack.c.l.b16 %v1076
    %v1169 = vunpack.c.h.b16 %v1076
    %v1170 = vunpack.c.l.b16 %v1077
    %v1171 = vunpack.c.h.b16 %v1077
    %v1172 = vunpack.c.l.b16 %v1078
    %v1173 = vunpack.c.h.b16 %v1078
    %v1174 = vunpack.c.l.b16 %v1079
    %v1175 = vunpack.c.h.b16 %v1079
    %v1176 = vunpack.c.l.b16 %v1080
    %v1177 = vunpack.c.h.b16 %v1080
    %v1178 = vunpack.c.l.b16 %v1081
    %v1179 = vunpack.c.h.b16 %v1081
    %v1180 = vunpack.c.l.b16 %v1082
    %v1181 = vunpack.c.h.b16 %v1082
    %v1182 = vunpack.c.l.b16 %v1083
    %v1183 = vunpack.c.h.b16 %v1083
    %v1184 = vunpack.c.l.b16 %v1084
    %v1185 = vunpack.c.h.b16 %v1084
    %v1186 = vunpack.c.l.b16 %v1085
    %v1187 = vunpack.c.h.b16 %v1085
    %v1188 = vunpack.c.l.b16 %v1086
    %v1189 = vunpack.c.h.b16 %v1086
    %v1190 = vunpack.c.l.b16 %v1087
    %v1191 = vunpack.c.h.b16 %v1087
    %v1192 = vunpack.c.l.b16 %v1088
    %v1193 = vunpack.c.h.b16 %v1088
    %v1194 = vunpack.c.l.b16 %v1089
    %v1195 = vunpack.c.h.b16 %v1089
    %v1196 = vunpack.c.l.b16 %v1090
    %v1197 = vunpack.c.h.b16 %v1090
    %v1198 = vunpack.c.l.b16 %v1091
    %v1199 = vunpack.c.h.b16 %v1091
    %v1200 = vunpack.c.l.b16 %v1092
    %v1201 = vunpack.c.h.b16 %v1092
    %v1202 = vpack.c.b16 %v1140, %v1138
    %v1203 = vpack.c.b16 %v1141, %v1139
    %v1204 = vpack.c.b16 %v1144, %v1142
    %v1205 = vpack.c.b16 %v1145, %v1143
    %v1206 = vpack.c.b16 %v1148, %v1146
    %v1207 = vpack.c.b16 %v1149, %v1147
    %v1208 = vpack.c.b16 %v1152, %v1150
    %v1209 = vpack.c.b16 %v1153, %v1151
    %v1210 = vpack.c.b16 %v1156, %v1154
    %v1211 = vpack.c.b16 %v1157, %v1155
    %v1212 = vpack.c.b16 %v1160, %v1158
    %v1213 = vpack.c.b16 %v1161, %v1159
    %v1214 = vpack.c.b16 %v1164, %v1162
    %v1215 = vpack.c.b16 %v1165, %v1163
    %v1216 = vpack.c.b16 %v1168, %v1166
    %v1217 = vpack.c.b16 %v1169, %v1167
    %v1218 = vpack.c.b16 %v1172, %v1170
    %v1219 = vpack.c.b16 %v1173, %v1171
    %v1220 = vpack.c.b16 %v1176, %v1174
    %v1221 = vpack.c.b16 %v1177, %v1175
    %v1222 = vpack.c.b16 %v1180, %v1178
    %v1223 = vpack.c.b16 %v1181, %v1179
    %v1224 = vpack.c.b16 %v1184, %v1182
    %v1225 = vpack.c.b16 %v1185, %v1183
    %v1226 = vpack.c.b16 %v1188, %v1186
    %v1227 = vpack.c.b16 %v1189, %v1187
    %v1228 = vpack.c.b16 %v1192, %v1190
    %v1229 = vpack.c.b16 %v1193, %v1191
    %v1230 = vpack.c.b16 %v1196, %v1194
    %v1231 = vpack.c.b16 %v1197, %v1195
    %v1232 = vpack.c.b16 %v1200, %v1198
    %v1233 = vpack.c.b16 %v1201, %v1199
    %1266 = vmatprep.subr.bf16.mxu0 %v1217
    %1267 = vmatpush1.bf16.msra.mxu0 %v1216
    %1268 = vmatprep.subr.bf16.mxu0 %v1215
    %1269 = vmatpush1.bf16.msra.mxu0 %v1214
    %1270 = vmatprep.subr.bf16.mxu0 %v1213
    %1271 = vmatpush1.bf16.msra.mxu0 %v1212
    %1272 = vmatprep.subr.bf16.mxu0 %v1211
    %1273 = vmatpush1.bf16.msra.mxu0 %v1210
    %1274 = vmatprep.subr.bf16.mxu0 %v1209
    %1275 = vmatpush1.bf16.msra.mxu0 %v1208
    %1276 = vmatprep.subr.bf16.mxu0 %v1207
    %1277 = vmatpush1.bf16.msra.mxu0 %v1206
    %1278 = vmatprep.subr.bf16.mxu0 %v1205
    %1279 = vmatpush1.bf16.msra.mxu0 %v1204
    %1280 = vmatprep.subr.bf16.mxu0 %v1203
    %1281 = vmatpush1.bf16.msra.mxu0 %v1202
    %1282 = vmatprep.subr.bf16.mxu0 %v1233
    %1283 = vmatpush2.bf16.msra.mxu0 %v1232
    %1284 = vmatprep.subr.bf16.mxu0 %v1231
    %1285 = vmatpush2.bf16.msra.mxu0 %v1230
    %1286 = vmatprep.subr.bf16.mxu0 %v1229
    %1287 = vmatpush2.bf16.msra.mxu0 %v1228
    %1288 = vmatprep.subr.bf16.mxu0 %v1227
    %1289 = vmatpush2.bf16.msra.mxu0 %v1226
    %1290 = vmatprep.subr.bf16.mxu0 %v1225
    %1291 = vmatpush2.bf16.msra.mxu0 %v1224
    %1292 = vmatprep.subr.bf16.mxu0 %v1223
    %1293 = vmatpush2.bf16.msra.mxu0 %v1222
    %1294 = vmatprep.subr.bf16.mxu0 %v1221
    %1295 = vmatpush2.bf16.msra.mxu0 %v1220
    %1296 = vmatprep.subr.bf16.mxu0 %v1219
    %1297 = vmatpush2.bf16.msra.mxu0 %v1218
    %1298 = vmatprep.mubr.bf16.mxu0 %v1059
    %1299 = vmatmul.mubr.bf16.gmra.mxu0 %v1058
    %v1300 = vpop.f32.mrf.mxu0
    %v1301 = vadd.f32 %v1099, %v1300
    %v1302 = vpop.f32.mrf.mxu0
    %v1303 = vadd.f32 %v1103, %v1302
    %v1304 = vpop.f32.mrf.mxu0
    %v1305 = vpop.f32.mrf.mxu0
    %1306 = vdwg.mxu0
    %v1307 = vmax.f32 %v1301, 0.0
    %v1308 = vmax.f32 %v1303, 0.0
    %v1309 = vpack.c.bf16 %v1307, %v1307
    %v1310 = vpack.c.bf16 %v1308, %v1308
    %s1311 = scalar_lea.vmem [#allocation2], 1280
    %v1312 = vld [vmem:[%s1311] sm:$0xff]
    %v1313 = vld [vmem:[%s1311 + $0x8] sm:$0xff]
    %v1314 = vld [vmem:[%s1311 + $0x10] sm:$0xff]
    %v1315 = vld [vmem:[%s1311 + $0x18] sm:$0xff]
    %v1316 = vld [vmem:[%s1311 + $0x20] sm:$0xff]
    %v1317 = vld [vmem:[%s1311 + $0x28] sm:$0xff]
    %v1318 = vld [vmem:[%s1311 + $0x30] sm:$0xff]
    %v1319 = vld [vmem:[%s1311 + $0x38] sm:$0xff]
    %v1320 = vld [vmem:[%s1311 + $0x40] sm:$0xff]
    %v1321 = vld [vmem:[%s1311 + $0x48] sm:$0xff]
    %v1322 = vld [vmem:[%s1311 + $0x50] sm:$0xff]
    %v1323 = vld [vmem:[%s1311 + $0x58] sm:$0xff]
    %v1324 = vld [vmem:[%s1311 + $0x60] sm:$0xff]
    %v1325 = vld [vmem:[%s1311 + $0x68] sm:$0xff]
    %v1326 = vld [vmem:[%s1311 + $0x70] sm:$0xff]
    %v1327 = vld [vmem:[%s1311 + $0x78] sm:$0xff]
    %v1328 = vld [vmem:[%s1311 + $0x80] sm:$0xff]
    %v1329 = vld [vmem:[%s1311 + $0x88] sm:$0xff]
    %v1330 = vld [vmem:[%s1311 + $0x90] sm:$0xff]
    %v1331 = vld [vmem:[%s1311 + $0x98] sm:$0xff]
    %v1332 = vld [vmem:[%s1311 + $0xa0] sm:$0xff]
    %v1333 = vld [vmem:[%s1311 + $0xa8] sm:$0xff]
    %v1334 = vld [vmem:[%s1311 + $0xb0] sm:$0xff]
    %v1335 = vld [vmem:[%s1311 + $0xb8] sm:$0xff]
    %v1336 = vld [vmem:[%s1311 + $0xc0] sm:$0xff]
    %v1337 = vld [vmem:[%s1311 + $0xc8] sm:$0xff]
    %v1338 = vld [vmem:[%s1311 + $0xd0] sm:$0xff]
    %v1339 = vld [vmem:[%s1311 + $0xd8] sm:$0xff]
    %v1340 = vld [vmem:[%s1311 + $0xe0] sm:$0xff]
    %v1341 = vld [vmem:[%s1311 + $0xe8] sm:$0xff]
    %v1342 = vld [vmem:[%s1311 + $0xf0] sm:$0xff]
    %v1343 = vld [vmem:[%s1311 + $0xf8] sm:$0xff]
    %s1344 = scalar_lea.vmem [#allocation4], 5
    %v1345 = vld [vmem:[%s1344] ss:$8 sm:$0x3]
    %v1347 = vlaneseq
    %v1348 = vshrl.u32 %v1347, 7
    %v1349 = vsub.s32 0, %v1348
    %v1350 = vrot.slane %v1345, %v1349
    %v1351 = vlaneseq
    %v1352 = vshrl.u32 %v1351, 7
    %v1353 = vsub.s32 1, %v1352
    %v1354 = vrot.slane %v1345, %v1353
    %v1389 = vunpack.c.l.b16 %v1312
    %v1390 = vunpack.c.h.b16 %v1312
    %v1391 = vunpack.c.l.b16 %v1313
    %v1392 = vunpack.c.h.b16 %v1313
    %v1393 = vunpack.c.l.b16 %v1314
    %v1394 = vunpack.c.h.b16 %v1314
    %v1395 = vunpack.c.l.b16 %v1315
    %v1396 = vunpack.c.h.b16 %v1315
    %v1397 = vunpack.c.l.b16 %v1316
    %v1398 = vunpack.c.h.b16 %v1316
    %v1399 = vunpack.c.l.b16 %v1317
    %v1400 = vunpack.c.h.b16 %v1317
    %v1401 = vunpack.c.l.b16 %v1318
    %v1402 = vunpack.c.h.b16 %v1318
    %v1403 = vunpack.c.l.b16 %v1319
    %v1404 = vunpack.c.h.b16 %v1319
    %v1405 = vunpack.c.l.b16 %v1320
    %v1406 = vunpack.c.h.b16 %v1320
    %v1407 = vunpack.c.l.b16 %v1321
    %v1408 = vunpack.c.h.b16 %v1321
    %v1409 = vunpack.c.l.b16 %v1322
    %v1410 = vunpack.c.h.b16 %v1322
    %v1411 = vunpack.c.l.b16 %v1323
    %v1412 = vunpack.c.h.b16 %v1323
    %v1413 = vunpack.c.l.b16 %v1324
    %v1414 = vunpack.c.h.b16 %v1324
    %v1415 = vunpack.c.l.b16 %v1325
    %v1416 = vunpack.c.h.b16 %v1325
    %v1417 = vunpack.c.l.b16 %v1326
    %v1418 = vunpack.c.h.b16 %v1326
    %v1419 = vunpack.c.l.b16 %v1327
    %v1420 = vunpack.c.h.b16 %v1327
    %v1421 = vunpack.c.l.b16 %v1328
    %v1422 = vunpack.c.h.b16 %v1328
    %v1423 = vunpack.c.l.b16 %v1329
    %v1424 = vunpack.c.h.b16 %v1329
    %v1425 = vunpack.c.l.b16 %v1330
    %v1426 = vunpack.c.h.b16 %v1330
    %v1427 = vunpack.c.l.b16 %v1331
    %v1428 = vunpack.c.h.b16 %v1331
    %v1429 = vunpack.c.l.b16 %v1332
    %v1430 = vunpack.c.h.b16 %v1332
    %v1431 = vunpack.c.l.b16 %v1333
    %v1432 = vunpack.c.h.b16 %v1333
    %v1433 = vunpack.c.l.b16 %v1334
    %v1434 = vunpack.c.h.b16 %v1334
    %v1435 = vunpack.c.l.b16 %v1335
    %v1436 = vunpack.c.h.b16 %v1335
    %v1437 = vunpack.c.l.b16 %v1336
    %v1438 = vunpack.c.h.b16 %v1336
    %v1439 = vunpack.c.l.b16 %v1337
    %v1440 = vunpack.c.h.b16 %v1337
    %v1441 = vunpack.c.l.b16 %v1338
    %v1442 = vunpack.c.h.b16 %v1338
    %v1443 = vunpack.c.l.b16 %v1339
    %v1444 = vunpack.c.h.b16 %v1339
    %v1445 = vunpack.c.l.b16 %v1340
    %v1446 = vunpack.c.h.b16 %v1340
    %v1447 = vunpack.c.l.b16 %v1341
    %v1448 = vunpack.c.h.b16 %v1341
    %v1449 = vunpack.c.l.b16 %v1342
    %v1450 = vunpack.c.h.b16 %v1342
    %v1451 = vunpack.c.l.b16 %v1343
    %v1452 = vunpack.c.h.b16 %v1343
    %v1453 = vpack.c.b16 %v1391, %v1389
    %v1454 = vpack.c.b16 %v1392, %v1390
    %v1455 = vpack.c.b16 %v1395, %v1393
    %v1456 = vpack.c.b16 %v1396, %v1394
    %v1457 = vpack.c.b16 %v1399, %v1397
    %v1458 = vpack.c.b16 %v1400, %v1398
    %v1459 = vpack.c.b16 %v1403, %v1401
    %v1460 = vpack.c.b16 %v1404, %v1402
    %v1461 = vpack.c.b16 %v1407, %v1405
    %v1462 = vpack.c.b16 %v1408, %v1406
    %v1463 = vpack.c.b16 %v1411, %v1409
    %v1464 = vpack.c.b16 %v1412, %v1410
    %v1465 = vpack.c.b16 %v1415, %v1413
    %v1466 = vpack.c.b16 %v1416, %v1414
    %v1467 = vpack.c.b16 %v1419, %v1417
    %v1468 = vpack.c.b16 %v1420, %v1418
    %v1469 = vpack.c.b16 %v1423, %v1421
    %v1470 = vpack.c.b16 %v1424, %v1422
    %v1471 = vpack.c.b16 %v1427, %v1425
    %v1472 = vpack.c.b16 %v1428, %v1426
    %v1473 = vpack.c.b16 %v1431, %v1429
    %v1474 = vpack.c.b16 %v1432, %v1430
    %v1475 = vpack.c.b16 %v1435, %v1433
    %v1476 = vpack.c.b16 %v1436, %v1434
    %v1477 = vpack.c.b16 %v1439, %v1437
    %v1478 = vpack.c.b16 %v1440, %v1438
    %v1479 = vpack.c.b16 %v1443, %v1441
    %v1480 = vpack.c.b16 %v1444, %v1442
    %v1481 = vpack.c.b16 %v1447, %v1445
    %v1482 = vpack.c.b16 %v1448, %v1446
    %v1483 = vpack.c.b16 %v1451, %v1449
    %v1484 = vpack.c.b16 %v1452, %v1450
    %1517 = vmatprep.subr.bf16.mxu0 %v1468
    %1518 = vmatpush1.bf16.msra.mxu0 %v1467
    %1519 = vmatprep.subr.bf16.mxu0 %v1466
    %1520 = vmatpush1.bf16.msra.mxu0 %v1465
    %1521 = vmatprep.subr.bf16.mxu0 %v1464
    %1522 = vmatpush1.bf16.msra.mxu0 %v1463
    %1523 = vmatprep.subr.bf16.mxu0 %v1462
    %1524 = vmatpush1.bf16.msra.mxu0 %v1461
    %1525 = vmatprep.subr.bf16.mxu0 %v1460
    %1526 = vmatpush1.bf16.msra.mxu0 %v1459
    %1527 = vmatprep.subr.bf16.mxu0 %v1458
    %1528 = vmatpush1.bf16.msra.mxu0 %v1457
    %1529 = vmatprep.subr.bf16.mxu0 %v1456
    %1530 = vmatpush1.bf16.msra.mxu0 %v1455
    %1531 = vmatprep.subr.bf16.mxu0 %v1454
    %1532 = vmatpush1.bf16.msra.mxu0 %v1453
    %1533 = vmatprep.subr.bf16.mxu0 %v1484
    %1534 = vmatpush2.bf16.msra.mxu0 %v1483
    %1535 = vmatprep.subr.bf16.mxu0 %v1482
    %1536 = vmatpush2.bf16.msra.mxu0 %v1481
    %1537 = vmatprep.subr.bf16.mxu0 %v1480
    %1538 = vmatpush2.bf16.msra.mxu0 %v1479
    %1539 = vmatprep.subr.bf16.mxu0 %v1478
    %1540 = vmatpush2.bf16.msra.mxu0 %v1477
    %1541 = vmatprep.subr.bf16.mxu0 %v1476
    %1542 = vmatpush2.bf16.msra.mxu0 %v1475
    %1543 = vmatprep.subr.bf16.mxu0 %v1474
    %1544 = vmatpush2.bf16.msra.mxu0 %v1473
    %1545 = vmatprep.subr.bf16.mxu0 %v1472
    %1546 = vmatpush2.bf16.msra.mxu0 %v1471
    %1547 = vmatprep.subr.bf16.mxu0 %v1470
    %1548 = vmatpush2.bf16.msra.mxu0 %v1469
    %1549 = vmatprep.mubr.bf16.mxu0 %v1310
    %1550 = vmatmul.mubr.bf16.gmra.mxu0 %v1309
    %v1551 = vpop.f32.mrf.mxu0
    %v1552 = vadd.f32 %v1350, %v1551
    %v1553 = vpop.f32.mrf.mxu0
    %v1554 = vadd.f32 %v1354, %v1553
    %v1555 = vpop.f32.mrf.mxu0
    %v1556 = vpop.f32.mrf.mxu0
    %1557 = vdwg.mxu0
    %v1558 = vmax.f32 %v1552, 0.0
    %v1559 = vmax.f32 %v1554, 0.0
    %v1560 = vpack.c.bf16 %v1558, %v1558
    %v1561 = vpack.c.bf16 %v1559, %v1559
    %s1562 = scalar_lea.vmem [#allocation2], 1536
    %v1563 = vld [vmem:[%s1562] sm:$0xff]
    %v1564 = vld [vmem:[%s1562 + $0x8] sm:$0xff]
    %v1565 = vld [vmem:[%s1562 + $0x10] sm:$0xff]
    %v1566 = vld [vmem:[%s1562 + $0x18] sm:$0xff]
    %v1567 = vld [vmem:[%s1562 + $0x20] sm:$0xff]
    %v1568 = vld [vmem:[%s1562 + $0x28] sm:$0xff]
    %v1569 = vld [vmem:[%s1562 + $0x30] sm:$0xff]
    %v1570 = vld [vmem:[%s1562 + $0x38] sm:$0xff]
    %v1571 = vld [vmem:[%s1562 + $0x40] sm:$0xff]
    %v1572 = vld [vmem:[%s1562 + $0x48] sm:$0xff]
    %v1573 = vld [vmem:[%s1562 + $0x50] sm:$0xff]
    %v1574 = vld [vmem:[%s1562 + $0x58] sm:$0xff]
    %v1575 = vld [vmem:[%s1562 + $0x60] sm:$0xff]
    %v1576 = vld [vmem:[%s1562 + $0x68] sm:$0xff]
    %v1577 = vld [vmem:[%s1562 + $0x70] sm:$0xff]
    %v1578 = vld [vmem:[%s1562 + $0x78] sm:$0xff]
    %v1579 = vld [vmem:[%s1562 + $0x80] sm:$0xff]
    %v1580 = vld [vmem:[%s1562 + $0x88] sm:$0xff]
    %v1581 = vld [vmem:[%s1562 + $0x90] sm:$0xff]
    %v1582 = vld [vmem:[%s1562 + $0x98] sm:$0xff]
    %v1583 = vld [vmem:[%s1562 + $0xa0] sm:$0xff]
    %v1584 = vld [vmem:[%s1562 + $0xa8] sm:$0xff]
    %v1585 = vld [vmem:[%s1562 + $0xb0] sm:$0xff]
    %v1586 = vld [vmem:[%s1562 + $0xb8] sm:$0xff]
    %v1587 = vld [vmem:[%s1562 + $0xc0] sm:$0xff]
    %v1588 = vld [vmem:[%s1562 + $0xc8] sm:$0xff]
    %v1589 = vld [vmem:[%s1562 + $0xd0] sm:$0xff]
    %v1590 = vld [vmem:[%s1562 + $0xd8] sm:$0xff]
    %v1591 = vld [vmem:[%s1562 + $0xe0] sm:$0xff]
    %v1592 = vld [vmem:[%s1562 + $0xe8] sm:$0xff]
    %v1593 = vld [vmem:[%s1562 + $0xf0] sm:$0xff]
    %v1594 = vld [vmem:[%s1562 + $0xf8] sm:$0xff]
    %s1595 = scalar_lea.vmem [#allocation4], 6
    %v1596 = vld [vmem:[%s1595] ss:$8 sm:$0x3]
    %v1598 = vlaneseq
    %v1599 = vshrl.u32 %v1598, 7
    %v1600 = vsub.s32 0, %v1599
    %v1601 = vrot.slane %v1596, %v1600
    %v1602 = vlaneseq
    %v1603 = vshrl.u32 %v1602, 7
    %v1604 = vsub.s32 1, %v1603
    %v1605 = vrot.slane %v1596, %v1604
    %v1640 = vunpack.c.l.b16 %v1563
    %v1641 = vunpack.c.h.b16 %v1563
    %v1642 = vunpack.c.l.b16 %v1564
    %v1643 = vunpack.c.h.b16 %v1564
    %v1644 = vunpack.c.l.b16 %v1565
    %v1645 = vunpack.c.h.b16 %v1565
    %v1646 = vunpack.c.l.b16 %v1566
    %v1647 = vunpack.c.h.b16 %v1566
    %v1648 = vunpack.c.l.b16 %v1567
    %v1649 = vunpack.c.h.b16 %v1567
    %v1650 = vunpack.c.l.b16 %v1568
    %v1651 = vunpack.c.h.b16 %v1568
    %v1652 = vunpack.c.l.b16 %v1569
    %v1653 = vunpack.c.h.b16 %v1569
    %v1654 = vunpack.c.l.b16 %v1570
    %v1655 = vunpack.c.h.b16 %v1570
    %v1656 = vunpack.c.l.b16 %v1571
    %v1657 = vunpack.c.h.b16 %v1571
    %v1658 = vunpack.c.l.b16 %v1572
    %v1659 = vunpack.c.h.b16 %v1572
    %v1660 = vunpack.c.l.b16 %v1573
    %v1661 = vunpack.c.h.b16 %v1573
    %v1662 = vunpack.c.l.b16 %v1574
    %v1663 = vunpack.c.h.b16 %v1574
    %v1664 = vunpack.c.l.b16 %v1575
    %v1665 = vunpack.c.h.b16 %v1575
    %v1666 = vunpack.c.l.b16 %v1576
    %v1667 = vunpack.c.h.b16 %v1576
    %v1668 = vunpack.c.l.b16 %v1577
    %v1669 = vunpack.c.h.b16 %v1577
    %v1670 = vunpack.c.l.b16 %v1578
    %v1671 = vunpack.c.h.b16 %v1578
    %v1672 = vunpack.c.l.b16 %v1579
    %v1673 = vunpack.c.h.b16 %v1579
    %v1674 = vunpack.c.l.b16 %v1580
    %v1675 = vunpack.c.h.b16 %v1580
    %v1676 = vunpack.c.l.b16 %v1581
    %v1677 = vunpack.c.h.b16 %v1581
    %v1678 = vunpack.c.l.b16 %v1582
    %v1679 = vunpack.c.h.b16 %v1582
    %v1680 = vunpack.c.l.b16 %v1583
    %v1681 = vunpack.c.h.b16 %v1583
    %v1682 = vunpack.c.l.b16 %v1584
    %v1683 = vunpack.c.h.b16 %v1584
    %v1684 = vunpack.c.l.b16 %v1585
    %v1685 = vunpack.c.h.b16 %v1585
    %v1686 = vunpack.c.l.b16 %v1586
    %v1687 = vunpack.c.h.b16 %v1586
    %v1688 = vunpack.c.l.b16 %v1587
    %v1689 = vunpack.c.h.b16 %v1587
    %v1690 = vunpack.c.l.b16 %v1588
    %v1691 = vunpack.c.h.b16 %v1588
    %v1692 = vunpack.c.l.b16 %v1589
    %v1693 = vunpack.c.h.b16 %v1589
    %v1694 = vunpack.c.l.b16 %v1590
    %v1695 = vunpack.c.h.b16 %v1590
    %v1696 = vunpack.c.l.b16 %v1591
    %v1697 = vunpack.c.h.b16 %v1591
    %v1698 = vunpack.c.l.b16 %v1592
    %v1699 = vunpack.c.h.b16 %v1592
    %v1700 = vunpack.c.l.b16 %v1593
    %v1701 = vunpack.c.h.b16 %v1593
    %v1702 = vunpack.c.l.b16 %v1594
    %v1703 = vunpack.c.h.b16 %v1594
    %v1704 = vpack.c.b16 %v1642, %v1640
    %v1705 = vpack.c.b16 %v1643, %v1641
    %v1706 = vpack.c.b16 %v1646, %v1644
    %v1707 = vpack.c.b16 %v1647, %v1645
    %v1708 = vpack.c.b16 %v1650, %v1648
    %v1709 = vpack.c.b16 %v1651, %v1649
    %v1710 = vpack.c.b16 %v1654, %v1652
    %v1711 = vpack.c.b16 %v1655, %v1653
    %v1712 = vpack.c.b16 %v1658, %v1656
    %v1713 = vpack.c.b16 %v1659, %v1657
    %v1714 = vpack.c.b16 %v1662, %v1660
    %v1715 = vpack.c.b16 %v1663, %v1661
    %v1716 = vpack.c.b16 %v1666, %v1664
    %v1717 = vpack.c.b16 %v1667, %v1665
    %v1718 = vpack.c.b16 %v1670, %v1668
    %v1719 = vpack.c.b16 %v1671, %v1669
    %v1720 = vpack.c.b16 %v1674, %v1672
    %v1721 = vpack.c.b16 %v1675, %v1673
    %v1722 = vpack.c.b16 %v1678, %v1676
    %v1723 = vpack.c.b16 %v1679, %v1677
    %v1724 = vpack.c.b16 %v1682, %v1680
    %v1725 = vpack.c.b16 %v1683, %v1681
    %v1726 = vpack.c.b16 %v1686, %v1684
    %v1727 = vpack.c.b16 %v1687, %v1685
    %v1728 = vpack.c.b16 %v1690, %v1688
    %v1729 = vpack.c.b16 %v1691, %v1689
    %v1730 = vpack.c.b16 %v1694, %v1692
    %v1731 = vpack.c.b16 %v1695, %v1693
    %v1732 = vpack.c.b16 %v1698, %v1696
    %v1733 = vpack.c.b16 %v1699, %v1697
    %v1734 = vpack.c.b16 %v1702, %v1700
    %v1735 = vpack.c.b16 %v1703, %v1701
    %1768 = vmatprep.subr.bf16.mxu0 %v1719
    %1769 = vmatpush1.bf16.msra.mxu0 %v1718
    %1770 = vmatprep.subr.bf16.mxu0 %v1717
    %1771 = vmatpush1.bf16.msra.mxu0 %v1716
    %1772 = vmatprep.subr.bf16.mxu0 %v1715
    %1773 = vmatpush1.bf16.msra.mxu0 %v1714
    %1774 = vmatprep.subr.bf16.mxu0 %v1713
    %1775 = vmatpush1.bf16.msra.mxu0 %v1712
    %1776 = vmatprep.subr.bf16.mxu0 %v1711
    %1777 = vmatpush1.bf16.msra.mxu0 %v1710
    %1778 = vmatprep.subr.bf16.mxu0 %v1709
    %1779 = vmatpush1.bf16.msra.mxu0 %v1708
    %1780 = vmatprep.subr.bf16.mxu0 %v1707
    %1781 = vmatpush1.bf16.msra.mxu0 %v1706
    %1782 = vmatprep.subr.bf16.mxu0 %v1705
    %1783 = vmatpush1.bf16.msra.mxu0 %v1704
    %1784 = vmatprep.subr.bf16.mxu0 %v1735
    %1785 = vmatpush2.bf16.msra.mxu0 %v1734
    %1786 = vmatprep.subr.bf16.mxu0 %v1733
    %1787 = vmatpush2.bf16.msra.mxu0 %v1732
    %1788 = vmatprep.subr.bf16.mxu0 %v1731
    %1789 = vmatpush2.bf16.msra.mxu0 %v1730
    %1790 = vmatprep.subr.bf16.mxu0 %v1729
    %1791 = vmatpush2.bf16.msra.mxu0 %v1728
    %1792 = vmatprep.subr.bf16.mxu0 %v1727
    %1793 = vmatpush2.bf16.msra.mxu0 %v1726
    %1794 = vmatprep.subr.bf16.mxu0 %v1725
    %1795 = vmatpush2.bf16.msra.mxu0 %v1724
    %1796 = vmatprep.subr.bf16.mxu0 %v1723
    %1797 = vmatpush2.bf16.msra.mxu0 %v1722
    %1798 = vmatprep.subr.bf16.mxu0 %v1721
    %1799 = vmatpush2.bf16.msra.mxu0 %v1720
    %1800 = vmatprep.mubr.bf16.mxu0 %v1561
    %1801 = vmatmul.mubr.bf16.gmra.mxu0 %v1560
    %v1802 = vpop.f32.mrf.mxu0
    %v1803 = vadd.f32 %v1601, %v1802
    %v1804 = vpop.f32.mrf.mxu0
    %v1805 = vadd.f32 %v1605, %v1804
    %v1806 = vpop.f32.mrf.mxu0
    %v1807 = vpop.f32.mrf.mxu0
    %1808 = vdwg.mxu0
    %v1809 = vadd.f32 %v1056, %v1803
    %v1810 = vadd.f32 %v1057, %v1805
    %v1811 = vpack.c.bf16 %v1809, %v1809
    %v1812 = vpack.c.bf16 %v1810, %v1810
    %s1813 = scalar_lea.vmem [#allocation2], 1792
    %v1814 = vld [vmem:[%s1813] sm:$0xff]
    %v1815 = vld [vmem:[%s1813 + $0x8] sm:$0xff]
    %v1816 = vld [vmem:[%s1813 + $0x10] sm:$0xff]
    %v1817 = vld [vmem:[%s1813 + $0x18] sm:$0xff]
    %v1818 = vld [vmem:[%s1813 + $0x20] sm:$0xff]
    %v1819 = vld [vmem:[%s1813 + $0x28] sm:$0xff]
    %v1820 = vld [vmem:[%s1813 + $0x30] sm:$0xff]
    %v1821 = vld [vmem:[%s1813 + $0x38] sm:$0xff]
    %v1822 = vld [vmem:[%s1813 + $0x40] sm:$0xff]
    %v1823 = vld [vmem:[%s1813 + $0x48] sm:$0xff]
    %v1824 = vld [vmem:[%s1813 + $0x50] sm:$0xff]
    %v1825 = vld [vmem:[%s1813 + $0x58] sm:$0xff]
    %v1826 = vld [vmem:[%s1813 + $0x60] sm:$0xff]
    %v1827 = vld [vmem:[%s1813 + $0x68] sm:$0xff]
    %v1828 = vld [vmem:[%s1813 + $0x70] sm:$0xff]
    %v1829 = vld [vmem:[%s1813 + $0x78] sm:$0xff]
    %v1830 = vld [vmem:[%s1813 + $0x80] sm:$0xff]
    %v1831 = vld [vmem:[%s1813 + $0x88] sm:$0xff]
    %v1832 = vld [vmem:[%s1813 + $0x90] sm:$0xff]
    %v1833 = vld [vmem:[%s1813 + $0x98] sm:$0xff]
    %v1834 = vld [vmem:[%s1813 + $0xa0] sm:$0xff]
    %v1835 = vld [vmem:[%s1813 + $0xa8] sm:$0xff]
    %v1836 = vld [vmem:[%s1813 + $0xb0] sm:$0xff]
    %v1837 = vld [vmem:[%s1813 + $0xb8] sm:$0xff]
    %v1838 = vld [vmem:[%s1813 + $0xc0] sm:$0xff]
    %v1839 = vld [vmem:[%s1813 + $0xc8] sm:$0xff]
    %v1840 = vld [vmem:[%s1813 + $0xd0] sm:$0xff]
    %v1841 = vld [vmem:[%s1813 + $0xd8] sm:$0xff]
    %v1842 = vld [vmem:[%s1813 + $0xe0] sm:$0xff]
    %v1843 = vld [vmem:[%s1813 + $0xe8] sm:$0xff]
    %v1844 = vld [vmem:[%s1813 + $0xf0] sm:$0xff]
    %v1845 = vld [vmem:[%s1813 + $0xf8] sm:$0xff]
    %s1846 = scalar_lea.vmem [#allocation4], 7
    %v1847 = vld [vmem:[%s1846] ss:$8 sm:$0x3]
    %v1849 = vlaneseq
    %v1850 = vshrl.u32 %v1849, 7
    %v1851 = vsub.s32 0, %v1850
    %v1852 = vrot.slane %v1847, %v1851
    %v1853 = vlaneseq
    %v1854 = vshrl.u32 %v1853, 7
    %v1855 = vsub.s32 1, %v1854
    %v1856 = vrot.slane %v1847, %v1855
    %v1891 = vunpack.c.l.b16 %v1814
    %v1892 = vunpack.c.h.b16 %v1814
    %v1893 = vunpack.c.l.b16 %v1815
    %v1894 = vunpack.c.h.b16 %v1815
    %v1895 = vunpack.c.l.b16 %v1816
    %v1896 = vunpack.c.h.b16 %v1816
    %v1897 = vunpack.c.l.b16 %v1817
    %v1898 = vunpack.c.h.b16 %v1817
    %v1899 = vunpack.c.l.b16 %v1818
    %v1900 = vunpack.c.h.b16 %v1818
    %v1901 = vunpack.c.l.b16 %v1819
    %v1902 = vunpack.c.h.b16 %v1819
    %v1903 = vunpack.c.l.b16 %v1820
    %v1904 = vunpack.c.h.b16 %v1820
    %v1905 = vunpack.c.l.b16 %v1821
    %v1906 = vunpack.c.h.b16 %v1821
    %v1907 = vunpack.c.l.b16 %v1822
    %v1908 = vunpack.c.h.b16 %v1822
    %v1909 = vunpack.c.l.b16 %v1823
    %v1910 = vunpack.c.h.b16 %v1823
    %v1911 = vunpack.c.l.b16 %v1824
    %v1912 = vunpack.c.h.b16 %v1824
    %v1913 = vunpack.c.l.b16 %v1825
    %v1914 = vunpack.c.h.b16 %v1825
    %v1915 = vunpack.c.l.b16 %v1826
    %v1916 = vunpack.c.h.b16 %v1826
    %v1917 = vunpack.c.l.b16 %v1827
    %v1918 = vunpack.c.h.b16 %v1827
    %v1919 = vunpack.c.l.b16 %v1828
    %v1920 = vunpack.c.h.b16 %v1828
    %v1921 = vunpack.c.l.b16 %v1829
    %v1922 = vunpack.c.h.b16 %v1829
    %v1923 = vunpack.c.l.b16 %v1830
    %v1924 = vunpack.c.h.b16 %v1830
    %v1925 = vunpack.c.l.b16 %v1831
    %v1926 = vunpack.c.h.b16 %v1831
    %v1927 = vunpack.c.l.b16 %v1832
    %v1928 = vunpack.c.h.b16 %v1832
    %v1929 = vunpack.c.l.b16 %v1833
    %v1930 = vunpack.c.h.b16 %v1833
    %v1931 = vunpack.c.l.b16 %v1834
    %v1932 = vunpack.c.h.b16 %v1834
    %v1933 = vunpack.c.l.b16 %v1835
    %v1934 = vunpack.c.h.b16 %v1835
    %v1935 = vunpack.c.l.b16 %v1836
    %v1936 = vunpack.c.h.b16 %v1836
    %v1937 = vunpack.c.l.b16 %v1837
    %v1938 = vunpack.c.h.b16 %v1837
    %v1939 = vunpack.c.l.b16 %v1838
    %v1940 = vunpack.c.h.b16 %v1838
    %v1941 = vunpack.c.l.b16 %v1839
    %v1942 = vunpack.c.h.b16 %v1839
    %v1943 = vunpack.c.l.b16 %v1840
    %v1944 = vunpack.c.h.b16 %v1840
    %v1945 = vunpack.c.l.b16 %v1841
    %v1946 = vunpack.c.h.b16 %v1841
    %v1947 = vunpack.c.l.b16 %v1842
    %v1948 = vunpack.c.h.b16 %v1842
    %v1949 = vunpack.c.l.b16 %v1843
    %v1950 = vunpack.c.h.b16 %v1843
    %v1951 = vunpack.c.l.b16 %v1844
    %v1952 = vunpack.c.h.b16 %v1844
    %v1953 = vunpack.c.l.b16 %v1845
    %v1954 = vunpack.c.h.b16 %v1845
    %v1955 = vpack.c.b16 %v1893, %v1891
    %v1956 = vpack.c.b16 %v1894, %v1892
    %v1957 = vpack.c.b16 %v1897, %v1895
    %v1958 = vpack.c.b16 %v1898, %v1896
    %v1959 = vpack.c.b16 %v1901, %v1899
    %v1960 = vpack.c.b16 %v1902, %v1900
    %v1961 = vpack.c.b16 %v1905, %v1903
    %v1962 = vpack.c.b16 %v1906, %v1904
    %v1963 = vpack.c.b16 %v1909, %v1907
    %v1964 = vpack.c.b16 %v1910, %v1908
    %v1965 = vpack.c.b16 %v1913, %v1911
    %v1966 = vpack.c.b16 %v1914, %v1912
    %v1967 = vpack.c.b16 %v1917, %v1915
    %v1968 = vpack.c.b16 %v1918, %v1916
    %v1969 = vpack.c.b16 %v1921, %v1919
    %v1970 = vpack.c.b16 %v1922, %v1920
    %v1971 = vpack.c.b16 %v1925, %v1923
    %v1972 = vpack.c.b16 %v1926, %v1924
    %v1973 = vpack.c.b16 %v1929, %v1927
    %v1974 = vpack.c.b16 %v1930, %v1928
    %v1975 = vpack.c.b16 %v1933, %v1931
    %v1976 = vpack.c.b16 %v1934, %v1932
    %v1977 = vpack.c.b16 %v1937, %v1935
    %v1978 = vpack.c.b16 %v1938, %v1936
    %v1979 = vpack.c.b16 %v1941, %v1939
    %v1980 = vpack.c.b16 %v1942, %v1940
    %v1981 = vpack.c.b16 %v1945, %v1943
    %v1982 = vpack.c.b16 %v1946, %v1944
    %v1983 = vpack.c.b16 %v1949, %v1947
    %v1984 = vpack.c.b16 %v1950, %v1948
    %v1985 = vpack.c.b16 %v1953, %v1951
    %v1986 = vpack.c.b16 %v1954, %v1952
    %2019 = vmatprep.subr.bf16.mxu0 %v1970
    %2020 = vmatpush1.bf16.msra.mxu0 %v1969
    %2021 = vmatprep.subr.bf16.mxu0 %v1968
    %2022 = vmatpush1.bf16.msra.mxu0 %v1967
    %2023 = vmatprep.subr.bf16.mxu0 %v1966
    %2024 = vmatpush1.bf16.msra.mxu0 %v1965
    %2025 = vmatprep.subr.bf16.mxu0 %v1964
    %2026 = vmatpush1.bf16.msra.mxu0 %v1963
    %2027 = vmatprep.subr.bf16.mxu0 %v1962
    %2028 = vmatpush1.bf16.msra.mxu0 %v1961
    %2029 = vmatprep.subr.bf16.mxu0 %v1960
    %2030 = vmatpush1.bf16.msra.mxu0 %v1959
    %2031 = vmatprep.subr.bf16.mxu0 %v1958
    %2032 = vmatpush1.bf16.msra.mxu0 %v1957
    %2033 = vmatprep.subr.bf16.mxu0 %v1956
    %2034 = vmatpush1.bf16.msra.mxu0 %v1955
    %2035 = vmatprep.subr.bf16.mxu0 %v1986
    %2036 = vmatpush2.bf16.msra.mxu0 %v1985
    %2037 = vmatprep.subr.bf16.mxu0 %v1984
    %2038 = vmatpush2.bf16.msra.mxu0 %v1983
    %2039 = vmatprep.subr.bf16.mxu0 %v1982
    %2040 = vmatpush2.bf16.msra.mxu0 %v1981
    %2041 = vmatprep.subr.bf16.mxu0 %v1980
    %2042 = vmatpush2.bf16.msra.mxu0 %v1979
    %2043 = vmatprep.subr.bf16.mxu0 %v1978
    %2044 = vmatpush2.bf16.msra.mxu0 %v1977
    %2045 = vmatprep.subr.bf16.mxu0 %v1976
    %2046 = vmatpush2.bf16.msra.mxu0 %v1975
    %2047 = vmatprep.subr.bf16.mxu0 %v1974
    %2048 = vmatpush2.bf16.msra.mxu0 %v1973
    %2049 = vmatprep.subr.bf16.mxu0 %v1972
    %2050 = vmatpush2.bf16.msra.mxu0 %v1971
    %2051 = vmatprep.mubr.bf16.mxu0 %v1812
    %2052 = vmatmul.mubr.bf16.gmra.mxu0 %v1811
    %v2053 = vpop.f32.mrf.mxu0
    %v2054 = vadd.f32 %v1852, %v2053
    %v2055 = vpop.f32.mrf.mxu0
    %v2056 = vadd.f32 %v1856, %v2055
    %v2057 = vpop.f32.mrf.mxu0
    %v2058 = vpop.f32.mrf.mxu0
    %2059 = vdwg.mxu0
    %v2060 = vmax.f32 %v2054, 0.0
    %v2061 = vmax.f32 %v2056, 0.0
    %v2062 = vpack.c.bf16 %v2060, %v2060
    %v2063 = vpack.c.bf16 %v2061, %v2061
    %s2064 = scalar_lea.vmem [#allocation2], 2048
    %v2065 = vld [vmem:[%s2064] sm:$0xff]
    %v2066 = vld [vmem:[%s2064 + $0x8] sm:$0xff]
    %v2067 = vld [vmem:[%s2064 + $0x10] sm:$0xff]
    %v2068 = vld [vmem:[%s2064 + $0x18] sm:$0xff]
    %v2069 = vld [vmem:[%s2064 + $0x20] sm:$0xff]
    %v2070 = vld [vmem:[%s2064 + $0x28] sm:$0xff]
    %v2071 = vld [vmem:[%s2064 + $0x30] sm:$0xff]
    %v2072 = vld [vmem:[%s2064 + $0x38] sm:$0xff]
    %v2073 = vld [vmem:[%s2064 + $0x40] sm:$0xff]
    %v2074 = vld [vmem:[%s2064 + $0x48] sm:$0xff]
    %v2075 = vld [vmem:[%s2064 + $0x50] sm:$0xff]
    %v2076 = vld [vmem:[%s2064 + $0x58] sm:$0xff]
    %v2077 = vld [vmem:[%s2064 + $0x60] sm:$0xff]
    %v2078 = vld [vmem:[%s2064 + $0x68] sm:$0xff]
    %v2079 = vld [vmem:[%s2064 + $0x70] sm:$0xff]
    %v2080 = vld [vmem:[%s2064 + $0x78] sm:$0xff]
    %v2081 = vld [vmem:[%s2064 + $0x80] sm:$0xff]
    %v2082 = vld [vmem:[%s2064 + $0x88] sm:$0xff]
    %v2083 = vld [vmem:[%s2064 + $0x90] sm:$0xff]
    %v2084 = vld [vmem:[%s2064 + $0x98] sm:$0xff]
    %v2085 = vld [vmem:[%s2064 + $0xa0] sm:$0xff]
    %v2086 = vld [vmem:[%s2064 + $0xa8] sm:$0xff]
    %v2087 = vld [vmem:[%s2064 + $0xb0] sm:$0xff]
    %v2088 = vld [vmem:[%s2064 + $0xb8] sm:$0xff]
    %v2089 = vld [vmem:[%s2064 + $0xc0] sm:$0xff]
    %v2090 = vld [vmem:[%s2064 + $0xc8] sm:$0xff]
    %v2091 = vld [vmem:[%s2064 + $0xd0] sm:$0xff]
    %v2092 = vld [vmem:[%s2064 + $0xd8] sm:$0xff]
    %v2093 = vld [vmem:[%s2064 + $0xe0] sm:$0xff]
    %v2094 = vld [vmem:[%s2064 + $0xe8] sm:$0xff]
    %v2095 = vld [vmem:[%s2064 + $0xf0] sm:$0xff]
    %v2096 = vld [vmem:[%s2064 + $0xf8] sm:$0xff]
    %s2097 = scalar_lea.vmem [#allocation4], 16
    %v2098 = vld [vmem:[%s2097] ss:$8 sm:$0x3]
    %v2100 = vlaneseq
    %v2101 = vshrl.u32 %v2100, 7
    %v2102 = vsub.s32 0, %v2101
    %v2103 = vrot.slane %v2098, %v2102
    %v2104 = vlaneseq
    %v2105 = vshrl.u32 %v2104, 7
    %v2106 = vsub.s32 1, %v2105
    %v2107 = vrot.slane %v2098, %v2106
    %v2142 = vunpack.c.l.b16 %v2065
    %v2143 = vunpack.c.h.b16 %v2065
    %v2144 = vunpack.c.l.b16 %v2066
    %v2145 = vunpack.c.h.b16 %v2066
    %v2146 = vunpack.c.l.b16 %v2067
    %v2147 = vunpack.c.h.b16 %v2067
    %v2148 = vunpack.c.l.b16 %v2068
    %v2149 = vunpack.c.h.b16 %v2068
    %v2150 = vunpack.c.l.b16 %v2069
    %v2151 = vunpack.c.h.b16 %v2069
    %v2152 = vunpack.c.l.b16 %v2070
    %v2153 = vunpack.c.h.b16 %v2070
    %v2154 = vunpack.c.l.b16 %v2071
    %v2155 = vunpack.c.h.b16 %v2071
    %v2156 = vunpack.c.l.b16 %v2072
    %v2157 = vunpack.c.h.b16 %v2072
    %v2158 = vunpack.c.l.b16 %v2073
    %v2159 = vunpack.c.h.b16 %v2073
    %v2160 = vunpack.c.l.b16 %v2074
    %v2161 = vunpack.c.h.b16 %v2074
    %v2162 = vunpack.c.l.b16 %v2075
    %v2163 = vunpack.c.h.b16 %v2075
    %v2164 = vunpack.c.l.b16 %v2076
    %v2165 = vunpack.c.h.b16 %v2076
    %v2166 = vunpack.c.l.b16 %v2077
    %v2167 = vunpack.c.h.b16 %v2077
    %v2168 = vunpack.c.l.b16 %v2078
    %v2169 = vunpack.c.h.b16 %v2078
    %v2170 = vunpack.c.l.b16 %v2079
    %v2171 = vunpack.c.h.b16 %v2079
    %v2172 = vunpack.c.l.b16 %v2080
    %v2173 = vunpack.c.h.b16 %v2080
    %v2174 = vunpack.c.l.b16 %v2081
    %v2175 = vunpack.c.h.b16 %v2081
    %v2176 = vunpack.c.l.b16 %v2082
    %v2177 = vunpack.c.h.b16 %v2082
    %v2178 = vunpack.c.l.b16 %v2083
    %v2179 = vunpack.c.h.b16 %v2083
    %v2180 = vunpack.c.l.b16 %v2084
    %v2181 = vunpack.c.h.b16 %v2084
    %v2182 = vunpack.c.l.b16 %v2085
    %v2183 = vunpack.c.h.b16 %v2085
    %v2184 = vunpack.c.l.b16 %v2086
    %v2185 = vunpack.c.h.b16 %v2086
    %v2186 = vunpack.c.l.b16 %v2087
    %v2187 = vunpack.c.h.b16 %v2087
    %v2188 = vunpack.c.l.b16 %v2088
    %v2189 = vunpack.c.h.b16 %v2088
    %v2190 = vunpack.c.l.b16 %v2089
    %v2191 = vunpack.c.h.b16 %v2089
    %v2192 = vunpack.c.l.b16 %v2090
    %v2193 = vunpack.c.h.b16 %v2090
    %v2194 = vunpack.c.l.b16 %v2091
    %v2195 = vunpack.c.h.b16 %v2091
    %v2196 = vunpack.c.l.b16 %v2092
    %v2197 = vunpack.c.h.b16 %v2092
    %v2198 = vunpack.c.l.b16 %v2093
    %v2199 = vunpack.c.h.b16 %v2093
    %v2200 = vunpack.c.l.b16 %v2094
    %v2201 = vunpack.c.h.b16 %v2094
    %v2202 = vunpack.c.l.b16 %v2095
    %v2203 = vunpack.c.h.b16 %v2095
    %v2204 = vunpack.c.l.b16 %v2096
    %v2205 = vunpack.c.h.b16 %v2096
    %v2206 = vpack.c.b16 %v2144, %v2142
    %v2207 = vpack.c.b16 %v2145, %v2143
    %v2208 = vpack.c.b16 %v2148, %v2146
    %v2209 = vpack.c.b16 %v2149, %v2147
    %v2210 = vpack.c.b16 %v2152, %v2150
    %v2211 = vpack.c.b16 %v2153, %v2151
    %v2212 = vpack.c.b16 %v2156, %v2154
    %v2213 = vpack.c.b16 %v2157, %v2155
    %v2214 = vpack.c.b16 %v2160, %v2158
    %v2215 = vpack.c.b16 %v2161, %v2159
    %v2216 = vpack.c.b16 %v2164, %v2162
    %v2217 = vpack.c.b16 %v2165, %v2163
    %v2218 = vpack.c.b16 %v2168, %v2166
    %v2219 = vpack.c.b16 %v2169, %v2167
    %v2220 = vpack.c.b16 %v2172, %v2170
    %v2221 = vpack.c.b16 %v2173, %v2171
    %v2222 = vpack.c.b16 %v2176, %v2174
    %v2223 = vpack.c.b16 %v2177, %v2175
    %v2224 = vpack.c.b16 %v2180, %v2178
    %v2225 = vpack.c.b16 %v2181, %v2179
    %v2226 = vpack.c.b16 %v2184, %v2182
    %v2227 = vpack.c.b16 %v2185, %v2183
    %v2228 = vpack.c.b16 %v2188, %v2186
    %v2229 = vpack.c.b16 %v2189, %v2187
    %v2230 = vpack.c.b16 %v2192, %v2190
    %v2231 = vpack.c.b16 %v2193, %v2191
    %v2232 = vpack.c.b16 %v2196, %v2194
    %v2233 = vpack.c.b16 %v2197, %v2195
    %v2234 = vpack.c.b16 %v2200, %v2198
    %v2235 = vpack.c.b16 %v2201, %v2199
    %v2236 = vpack.c.b16 %v2204, %v2202
    %v2237 = vpack.c.b16 %v2205, %v2203
    %2270 = vmatprep.subr.bf16.mxu0 %v2221
    %2271 = vmatpush1.bf16.msra.mxu0 %v2220
    %2272 = vmatprep.subr.bf16.mxu0 %v2219
    %2273 = vmatpush1.bf16.msra.mxu0 %v2218
    %2274 = vmatprep.subr.bf16.mxu0 %v2217
    %2275 = vmatpush1.bf16.msra.mxu0 %v2216
    %2276 = vmatprep.subr.bf16.mxu0 %v2215
    %2277 = vmatpush1.bf16.msra.mxu0 %v2214
    %2278 = vmatprep.subr.bf16.mxu0 %v2213
    %2279 = vmatpush1.bf16.msra.mxu0 %v2212
    %2280 = vmatprep.subr.bf16.mxu0 %v2211
    %2281 = vmatpush1.bf16.msra.mxu0 %v2210
    %2282 = vmatprep.subr.bf16.mxu0 %v2209
    %2283 = vmatpush1.bf16.msra.mxu0 %v2208
    %2284 = vmatprep.subr.bf16.mxu0 %v2207
    %2285 = vmatpush1.bf16.msra.mxu0 %v2206
    %2286 = vmatprep.subr.bf16.mxu0 %v2237
    %2287 = vmatpush2.bf16.msra.mxu0 %v2236
    %2288 = vmatprep.subr.bf16.mxu0 %v2235
    %2289 = vmatpush2.bf16.msra.mxu0 %v2234
    %2290 = vmatprep.subr.bf16.mxu0 %v2233
    %2291 = vmatpush2.bf16.msra.mxu0 %v2232
    %2292 = vmatprep.subr.bf16.mxu0 %v2231
    %2293 = vmatpush2.bf16.msra.mxu0 %v2230
    %2294 = vmatprep.subr.bf16.mxu0 %v2229
    %2295 = vmatpush2.bf16.msra.mxu0 %v2228
    %2296 = vmatprep.subr.bf16.mxu0 %v2227
    %2297 = vmatpush2.bf16.msra.mxu0 %v2226
    %2298 = vmatprep.subr.bf16.mxu0 %v2225
    %2299 = vmatpush2.bf16.msra.mxu0 %v2224
    %2300 = vmatprep.subr.bf16.mxu0 %v2223
    %2301 = vmatpush2.bf16.msra.mxu0 %v2222
    %2302 = vmatprep.mubr.bf16.mxu0 %v2063
    %2303 = vmatmul.mubr.bf16.gmra.mxu0 %v2062
    %v2304 = vpop.f32.mrf.mxu0
    %v2305 = vadd.f32 %v2103, %v2304
    %v2306 = vpop.f32.mrf.mxu0
    %v2307 = vadd.f32 %v2107, %v2306
    %v2308 = vpop.f32.mrf.mxu0
    %v2309 = vpop.f32.mrf.mxu0
    %2310 = vdwg.mxu0
    %v2311 = vmax.f32 %v2305, 0.0
    %v2312 = vmax.f32 %v2307, 0.0
    %v2313 = vpack.c.bf16 %v2311, %v2311
    %v2314 = vpack.c.bf16 %v2312, %v2312
    %s2315 = scalar_lea.vmem [#allocation2], 2304
    %v2316 = vld [vmem:[%s2315] sm:$0xff]
    %v2317 = vld [vmem:[%s2315 + $0x8] sm:$0xff]
    %v2318 = vld [vmem:[%s2315 + $0x10] sm:$0xff]
    %v2319 = vld [vmem:[%s2315 + $0x18] sm:$0xff]
    %v2320 = vld [vmem:[%s2315 + $0x20] sm:$0xff]
    %v2321 = vld [vmem:[%s2315 + $0x28] sm:$0xff]
    %v2322 = vld [vmem:[%s2315 + $0x30] sm:$0xff]
    %v2323 = vld [vmem:[%s2315 + $0x38] sm:$0xff]
    %v2324 = vld [vmem:[%s2315 + $0x40] sm:$0xff]
    %v2325 = vld [vmem:[%s2315 + $0x48] sm:$0xff]
    %v2326 = vld [vmem:[%s2315 + $0x50] sm:$0xff]
    %v2327 = vld [vmem:[%s2315 + $0x58] sm:$0xff]
    %v2328 = vld [vmem:[%s2315 + $0x60] sm:$0xff]
    %v2329 = vld [vmem:[%s2315 + $0x68] sm:$0xff]
    %v2330 = vld [vmem:[%s2315 + $0x70] sm:$0xff]
    %v2331 = vld [vmem:[%s2315 + $0x78] sm:$0xff]
    %v2332 = vld [vmem:[%s2315 + $0x80] sm:$0xff]
    %v2333 = vld [vmem:[%s2315 + $0x88] sm:$0xff]
    %v2334 = vld [vmem:[%s2315 + $0x90] sm:$0xff]
    %v2335 = vld [vmem:[%s2315 + $0x98] sm:$0xff]
    %v2336 = vld [vmem:[%s2315 + $0xa0] sm:$0xff]
    %v2337 = vld [vmem:[%s2315 + $0xa8] sm:$0xff]
    %v2338 = vld [vmem:[%s2315 + $0xb0] sm:$0xff]
    %v2339 = vld [vmem:[%s2315 + $0xb8] sm:$0xff]
    %v2340 = vld [vmem:[%s2315 + $0xc0] sm:$0xff]
    %v2341 = vld [vmem:[%s2315 + $0xc8] sm:$0xff]
    %v2342 = vld [vmem:[%s2315 + $0xd0] sm:$0xff]
    %v2343 = vld [vmem:[%s2315 + $0xd8] sm:$0xff]
    %v2344 = vld [vmem:[%s2315 + $0xe0] sm:$0xff]
    %v2345 = vld [vmem:[%s2315 + $0xe8] sm:$0xff]
    %v2346 = vld [vmem:[%s2315 + $0xf0] sm:$0xff]
    %v2347 = vld [vmem:[%s2315 + $0xf8] sm:$0xff]
    %s2348 = scalar_lea.vmem [#allocation4], 17
    %v2349 = vld [vmem:[%s2348] ss:$8 sm:$0x3]
    %v2351 = vlaneseq
    %v2352 = vshrl.u32 %v2351, 7
    %v2353 = vsub.s32 0, %v2352
    %v2354 = vrot.slane %v2349, %v2353
    %v2355 = vlaneseq
    %v2356 = vshrl.u32 %v2355, 7
    %v2357 = vsub.s32 1, %v2356
    %v2358 = vrot.slane %v2349, %v2357
    %v2393 = vunpack.c.l.b16 %v2316
    %v2394 = vunpack.c.h.b16 %v2316
    %v2395 = vunpack.c.l.b16 %v2317
    %v2396 = vunpack.c.h.b16 %v2317
    %v2397 = vunpack.c.l.b16 %v2318
    %v2398 = vunpack.c.h.b16 %v2318
    %v2399 = vunpack.c.l.b16 %v2319
    %v2400 = vunpack.c.h.b16 %v2319
    %v2401 = vunpack.c.l.b16 %v2320
    %v2402 = vunpack.c.h.b16 %v2320
    %v2403 = vunpack.c.l.b16 %v2321
    %v2404 = vunpack.c.h.b16 %v2321
    %v2405 = vunpack.c.l.b16 %v2322
    %v2406 = vunpack.c.h.b16 %v2322
    %v2407 = vunpack.c.l.b16 %v2323
    %v2408 = vunpack.c.h.b16 %v2323
    %v2409 = vunpack.c.l.b16 %v2324
    %v2410 = vunpack.c.h.b16 %v2324
    %v2411 = vunpack.c.l.b16 %v2325
    %v2412 = vunpack.c.h.b16 %v2325
    %v2413 = vunpack.c.l.b16 %v2326
    %v2414 = vunpack.c.h.b16 %v2326
    %v2415 = vunpack.c.l.b16 %v2327
    %v2416 = vunpack.c.h.b16 %v2327
    %v2417 = vunpack.c.l.b16 %v2328
    %v2418 = vunpack.c.h.b16 %v2328
    %v2419 = vunpack.c.l.b16 %v2329
    %v2420 = vunpack.c.h.b16 %v2329
    %v2421 = vunpack.c.l.b16 %v2330
    %v2422 = vunpack.c.h.b16 %v2330
    %v2423 = vunpack.c.l.b16 %v2331
    %v2424 = vunpack.c.h.b16 %v2331
    %v2425 = vunpack.c.l.b16 %v2332
    %v2426 = vunpack.c.h.b16 %v2332
    %v2427 = vunpack.c.l.b16 %v2333
    %v2428 = vunpack.c.h.b16 %v2333
    %v2429 = vunpack.c.l.b16 %v2334
    %v2430 = vunpack.c.h.b16 %v2334
    %v2431 = vunpack.c.l.b16 %v2335
    %v2432 = vunpack.c.h.b16 %v2335
    %v2433 = vunpack.c.l.b16 %v2336
    %v2434 = vunpack.c.h.b16 %v2336
    %v2435 = vunpack.c.l.b16 %v2337
    %v2436 = vunpack.c.h.b16 %v2337
    %v2437 = vunpack.c.l.b16 %v2338
    %v2438 = vunpack.c.h.b16 %v2338
    %v2439 = vunpack.c.l.b16 %v2339
    %v2440 = vunpack.c.h.b16 %v2339
    %v2441 = vunpack.c.l.b16 %v2340
    %v2442 = vunpack.c.h.b16 %v2340
    %v2443 = vunpack.c.l.b16 %v2341
    %v2444 = vunpack.c.h.b16 %v2341
    %v2445 = vunpack.c.l.b16 %v2342
    %v2446 = vunpack.c.h.b16 %v2342
    %v2447 = vunpack.c.l.b16 %v2343
    %v2448 = vunpack.c.h.b16 %v2343
    %v2449 = vunpack.c.l.b16 %v2344
    %v2450 = vunpack.c.h.b16 %v2344
    %v2451 = vunpack.c.l.b16 %v2345
    %v2452 = vunpack.c.h.b16 %v2345
    %v2453 = vunpack.c.l.b16 %v2346
    %v2454 = vunpack.c.h.b16 %v2346
    %v2455 = vunpack.c.l.b16 %v2347
    %v2456 = vunpack.c.h.b16 %v2347
    %v2457 = vpack.c.b16 %v2395, %v2393
    %v2458 = vpack.c.b16 %v2396, %v2394
    %v2459 = vpack.c.b16 %v2399, %v2397
    %v2460 = vpack.c.b16 %v2400, %v2398
    %v2461 = vpack.c.b16 %v2403, %v2401
    %v2462 = vpack.c.b16 %v2404, %v2402
    %v2463 = vpack.c.b16 %v2407, %v2405
    %v2464 = vpack.c.b16 %v2408, %v2406
    %v2465 = vpack.c.b16 %v2411, %v2409
    %v2466 = vpack.c.b16 %v2412, %v2410
    %v2467 = vpack.c.b16 %v2415, %v2413
    %v2468 = vpack.c.b16 %v2416, %v2414
    %v2469 = vpack.c.b16 %v2419, %v2417
    %v2470 = vpack.c.b16 %v2420, %v2418
    %v2471 = vpack.c.b16 %v2423, %v2421
    %v2472 = vpack.c.b16 %v2424, %v2422
    %v2473 = vpack.c.b16 %v2427, %v2425
    %v2474 = vpack.c.b16 %v2428, %v2426
    %v2475 = vpack.c.b16 %v2431, %v2429
    %v2476 = vpack.c.b16 %v2432, %v2430
    %v2477 = vpack.c.b16 %v2435, %v2433
    %v2478 = vpack.c.b16 %v2436, %v2434
    %v2479 = vpack.c.b16 %v2439, %v2437
    %v2480 = vpack.c.b16 %v2440, %v2438
    %v2481 = vpack.c.b16 %v2443, %v2441
    %v2482 = vpack.c.b16 %v2444, %v2442
    %v2483 = vpack.c.b16 %v2447, %v2445
    %v2484 = vpack.c.b16 %v2448, %v2446
    %v2485 = vpack.c.b16 %v2451, %v2449
    %v2486 = vpack.c.b16 %v2452, %v2450
    %v2487 = vpack.c.b16 %v2455, %v2453
    %v2488 = vpack.c.b16 %v2456, %v2454
    %2521 = vmatprep.subr.bf16.mxu0 %v2472
    %2522 = vmatpush1.bf16.msra.mxu0 %v2471
    %2523 = vmatprep.subr.bf16.mxu0 %v2470
    %2524 = vmatpush1.bf16.msra.mxu0 %v2469
    %2525 = vmatprep.subr.bf16.mxu0 %v2468
    %2526 = vmatpush1.bf16.msra.mxu0 %v2467
    %2527 = vmatprep.subr.bf16.mxu0 %v2466
    %2528 = vmatpush1.bf16.msra.mxu0 %v2465
    %2529 = vmatprep.subr.bf16.mxu0 %v2464
    %2530 = vmatpush1.bf16.msra.mxu0 %v2463
    %2531 = vmatprep.subr.bf16.mxu0 %v2462
    %2532 = vmatpush1.bf16.msra.mxu0 %v2461
    %2533 = vmatprep.subr.bf16.mxu0 %v2460
    %2534 = vmatpush1.bf16.msra.mxu0 %v2459
    %2535 = vmatprep.subr.bf16.mxu0 %v2458
    %2536 = vmatpush1.bf16.msra.mxu0 %v2457
    %2537 = vmatprep.subr.bf16.mxu0 %v2488
    %2538 = vmatpush2.bf16.msra.mxu0 %v2487
    %2539 = vmatprep.subr.bf16.mxu0 %v2486
    %2540 = vmatpush2.bf16.msra.mxu0 %v2485
    %2541 = vmatprep.subr.bf16.mxu0 %v2484
    %2542 = vmatpush2.bf16.msra.mxu0 %v2483
    %2543 = vmatprep.subr.bf16.mxu0 %v2482
    %2544 = vmatpush2.bf16.msra.mxu0 %v2481
    %2545 = vmatprep.subr.bf16.mxu0 %v2480
    %2546 = vmatpush2.bf16.msra.mxu0 %v2479
    %2547 = vmatprep.subr.bf16.mxu0 %v2478
    %2548 = vmatpush2.bf16.msra.mxu0 %v2477
    %2549 = vmatprep.subr.bf16.mxu0 %v2476
    %2550 = vmatpush2.bf16.msra.mxu0 %v2475
    %2551 = vmatprep.subr.bf16.mxu0 %v2474
    %2552 = vmatpush2.bf16.msra.mxu0 %v2473
    %2553 = vmatprep.mubr.bf16.mxu0 %v2314
    %2554 = vmatmul.mubr.bf16.gmra.mxu0 %v2313
    %v2555 = vpop.f32.mrf.mxu0
    %v2556 = vadd.f32 %v2354, %v2555
    %v2557 = vpop.f32.mrf.mxu0
    %v2558 = vadd.f32 %v2358, %v2557
    %v2559 = vpop.f32.mrf.mxu0
    %v2560 = vpop.f32.mrf.mxu0
    %2561 = vdwg.mxu0
    %v2562 = vadd.f32 %v1809, %v2556
    %v2563 = vadd.f32 %v1810, %v2558
    %v2564 = vpack.c.bf16 %v2562, %v2562
    %v2565 = vpack.c.bf16 %v2563, %v2563
    %s2566 = scalar_lea.vmem [#allocation2], 2560
    %v2567 = vld [vmem:[%s2566] sm:$0xff]
    %v2568 = vld [vmem:[%s2566 + $0x8] sm:$0xff]
    %v2569 = vld [vmem:[%s2566 + $0x10] sm:$0xff]
    %v2570 = vld [vmem:[%s2566 + $0x18] sm:$0xff]
    %v2571 = vld [vmem:[%s2566 + $0x20] sm:$0xff]
    %v2572 = vld [vmem:[%s2566 + $0x28] sm:$0xff]
    %v2573 = vld [vmem:[%s2566 + $0x30] sm:$0xff]
    %v2574 = vld [vmem:[%s2566 + $0x38] sm:$0xff]
    %v2575 = vld [vmem:[%s2566 + $0x40] sm:$0xff]
    %v2576 = vld [vmem:[%s2566 + $0x48] sm:$0xff]
    %v2577 = vld [vmem:[%s2566 + $0x50] sm:$0xff]
    %v2578 = vld [vmem:[%s2566 + $0x58] sm:$0xff]
    %v2579 = vld [vmem:[%s2566 + $0x60] sm:$0xff]
    %v2580 = vld [vmem:[%s2566 + $0x68] sm:$0xff]
    %v2581 = vld [vmem:[%s2566 + $0x70] sm:$0xff]
    %v2582 = vld [vmem:[%s2566 + $0x78] sm:$0xff]
    %v2583 = vld [vmem:[%s2566 + $0x80] sm:$0xff]
    %v2584 = vld [vmem:[%s2566 + $0x88] sm:$0xff]
    %v2585 = vld [vmem:[%s2566 + $0x90] sm:$0xff]
    %v2586 = vld [vmem:[%s2566 + $0x98] sm:$0xff]
    %v2587 = vld [vmem:[%s2566 + $0xa0] sm:$0xff]
    %v2588 = vld [vmem:[%s2566 + $0xa8] sm:$0xff]
    %v2589 = vld [vmem:[%s2566 + $0xb0] sm:$0xff]
    %v2590 = vld [vmem:[%s2566 + $0xb8] sm:$0xff]
    %v2591 = vld [vmem:[%s2566 + $0xc0] sm:$0xff]
    %v2592 = vld [vmem:[%s2566 + $0xc8] sm:$0xff]
    %v2593 = vld [vmem:[%s2566 + $0xd0] sm:$0xff]
    %v2594 = vld [vmem:[%s2566 + $0xd8] sm:$0xff]
    %v2595 = vld [vmem:[%s2566 + $0xe0] sm:$0xff]
    %v2596 = vld [vmem:[%s2566 + $0xe8] sm:$0xff]
    %v2597 = vld [vmem:[%s2566 + $0xf0] sm:$0xff]
    %v2598 = vld [vmem:[%s2566 + $0xf8] sm:$0xff]
    %s2599 = scalar_lea.vmem [#allocation4], 18
    %v2600 = vld [vmem:[%s2599] ss:$8 sm:$0x3]
    %v2602 = vlaneseq
    %v2603 = vshrl.u32 %v2602, 7
    %v2604 = vsub.s32 0, %v2603
    %v2605 = vrot.slane %v2600, %v2604
    %v2606 = vlaneseq
    %v2607 = vshrl.u32 %v2606, 7
    %v2608 = vsub.s32 1, %v2607
    %v2609 = vrot.slane %v2600, %v2608
    %v2644 = vunpack.c.l.b16 %v2567
    %v2645 = vunpack.c.h.b16 %v2567
    %v2646 = vunpack.c.l.b16 %v2568
    %v2647 = vunpack.c.h.b16 %v2568
    %v2648 = vunpack.c.l.b16 %v2569
    %v2649 = vunpack.c.h.b16 %v2569
    %v2650 = vunpack.c.l.b16 %v2570
    %v2651 = vunpack.c.h.b16 %v2570
    %v2652 = vunpack.c.l.b16 %v2571
    %v2653 = vunpack.c.h.b16 %v2571
    %v2654 = vunpack.c.l.b16 %v2572
    %v2655 = vunpack.c.h.b16 %v2572
    %v2656 = vunpack.c.l.b16 %v2573
    %v2657 = vunpack.c.h.b16 %v2573
    %v2658 = vunpack.c.l.b16 %v2574
    %v2659 = vunpack.c.h.b16 %v2574
    %v2660 = vunpack.c.l.b16 %v2575
    %v2661 = vunpack.c.h.b16 %v2575
    %v2662 = vunpack.c.l.b16 %v2576
    %v2663 = vunpack.c.h.b16 %v2576
    %v2664 = vunpack.c.l.b16 %v2577
    %v2665 = vunpack.c.h.b16 %v2577
    %v2666 = vunpack.c.l.b16 %v2578
    %v2667 = vunpack.c.h.b16 %v2578
    %v2668 = vunpack.c.l.b16 %v2579
    %v2669 = vunpack.c.h.b16 %v2579
    %v2670 = vunpack.c.l.b16 %v2580
    %v2671 = vunpack.c.h.b16 %v2580
    %v2672 = vunpack.c.l.b16 %v2581
    %v2673 = vunpack.c.h.b16 %v2581
    %v2674 = vunpack.c.l.b16 %v2582
    %v2675 = vunpack.c.h.b16 %v2582
    %v2676 = vunpack.c.l.b16 %v2583
    %v2677 = vunpack.c.h.b16 %v2583
    %v2678 = vunpack.c.l.b16 %v2584
    %v2679 = vunpack.c.h.b16 %v2584
    %v2680 = vunpack.c.l.b16 %v2585
    %v2681 = vunpack.c.h.b16 %v2585
    %v2682 = vunpack.c.l.b16 %v2586
    %v2683 = vunpack.c.h.b16 %v2586
    %v2684 = vunpack.c.l.b16 %v2587
    %v2685 = vunpack.c.h.b16 %v2587
    %v2686 = vunpack.c.l.b16 %v2588
    %v2687 = vunpack.c.h.b16 %v2588
    %v2688 = vunpack.c.l.b16 %v2589
    %v2689 = vunpack.c.h.b16 %v2589
    %v2690 = vunpack.c.l.b16 %v2590
    %v2691 = vunpack.c.h.b16 %v2590
    %v2692 = vunpack.c.l.b16 %v2591
    %v2693 = vunpack.c.h.b16 %v2591
    %v2694 = vunpack.c.l.b16 %v2592
    %v2695 = vunpack.c.h.b16 %v2592
    %v2696 = vunpack.c.l.b16 %v2593
    %v2697 = vunpack.c.h.b16 %v2593
    %v2698 = vunpack.c.l.b16 %v2594
    %v2699 = vunpack.c.h.b16 %v2594
    %v2700 = vunpack.c.l.b16 %v2595
    %v2701 = vunpack.c.h.b16 %v2595
    %v2702 = vunpack.c.l.b16 %v2596
    %v2703 = vunpack.c.h.b16 %v2596
    %v2704 = vunpack.c.l.b16 %v2597
    %v2705 = vunpack.c.h.b16 %v2597
    %v2706 = vunpack.c.l.b16 %v2598
    %v2707 = vunpack.c.h.b16 %v2598
    %v2708 = vpack.c.b16 %v2646, %v2644
    %v2709 = vpack.c.b16 %v2647, %v2645
    %v2710 = vpack.c.b16 %v2650, %v2648
    %v2711 = vpack.c.b16 %v2651, %v2649
    %v2712 = vpack.c.b16 %v2654, %v2652
    %v2713 = vpack.c.b16 %v2655, %v2653
    %v2714 = vpack.c.b16 %v2658, %v2656
    %v2715 = vpack.c.b16 %v2659, %v2657
    %v2716 = vpack.c.b16 %v2662, %v2660
    %v2717 = vpack.c.b16 %v2663, %v2661
    %v2718 = vpack.c.b16 %v2666, %v2664
    %v2719 = vpack.c.b16 %v2667, %v2665
    %v2720 = vpack.c.b16 %v2670, %v2668
    %v2721 = vpack.c.b16 %v2671, %v2669
    %v2722 = vpack.c.b16 %v2674, %v2672
    %v2723 = vpack.c.b16 %v2675, %v2673
    %v2724 = vpack.c.b16 %v2678, %v2676
    %v2725 = vpack.c.b16 %v2679, %v2677
    %v2726 = vpack.c.b16 %v2682, %v2680
    %v2727 = vpack.c.b16 %v2683, %v2681
    %v2728 = vpack.c.b16 %v2686, %v2684
    %v2729 = vpack.c.b16 %v2687, %v2685
    %v2730 = vpack.c.b16 %v2690, %v2688
    %v2731 = vpack.c.b16 %v2691, %v2689
    %v2732 = vpack.c.b16 %v2694, %v2692
    %v2733 = vpack.c.b16 %v2695, %v2693
    %v2734 = vpack.c.b16 %v2698, %v2696
    %v2735 = vpack.c.b16 %v2699, %v2697
    %v2736 = vpack.c.b16 %v2702, %v2700
    %v2737 = vpack.c.b16 %v2703, %v2701
    %v2738 = vpack.c.b16 %v2706, %v2704
    %v2739 = vpack.c.b16 %v2707, %v2705
    %2772 = vmatprep.subr.bf16.mxu0 %v2723
    %2773 = vmatpush1.bf16.msra.mxu0 %v2722
    %2774 = vmatprep.subr.bf16.mxu0 %v2721
    %2775 = vmatpush1.bf16.msra.mxu0 %v2720
    %2776 = vmatprep.subr.bf16.mxu0 %v2719
    %2777 = vmatpush1.bf16.msra.mxu0 %v2718
    %2778 = vmatprep.subr.bf16.mxu0 %v2717
    %2779 = vmatpush1.bf16.msra.mxu0 %v2716
    %2780 = vmatprep.subr.bf16.mxu0 %v2715
    %2781 = vmatpush1.bf16.msra.mxu0 %v2714
    %2782 = vmatprep.subr.bf16.mxu0 %v2713
    %2783 = vmatpush1.bf16.msra.mxu0 %v2712
    %2784 = vmatprep.subr.bf16.mxu0 %v2711
    %2785 = vmatpush1.bf16.msra.mxu0 %v2710
    %2786 = vmatprep.subr.bf16.mxu0 %v2709
    %2787 = vmatpush1.bf16.msra.mxu0 %v2708
    %2788 = vmatprep.subr.bf16.mxu0 %v2739
    %2789 = vmatpush2.bf16.msra.mxu0 %v2738
    %2790 = vmatprep.subr.bf16.mxu0 %v2737
    %2791 = vmatpush2.bf16.msra.mxu0 %v2736
    %2792 = vmatprep.subr.bf16.mxu0 %v2735
    %2793 = vmatpush2.bf16.msra.mxu0 %v2734
    %2794 = vmatprep.subr.bf16.mxu0 %v2733
    %2795 = vmatpush2.bf16.msra.mxu0 %v2732
    %2796 = vmatprep.subr.bf16.mxu0 %v2731
    %2797 = vmatpush2.bf16.msra.mxu0 %v2730
    %2798 = vmatprep.subr.bf16.mxu0 %v2729
    %2799 = vmatpush2.bf16.msra.mxu0 %v2728
    %2800 = vmatprep.subr.bf16.mxu0 %v2727
    %2801 = vmatpush2.bf16.msra.mxu0 %v2726
    %2802 = vmatprep.subr.bf16.mxu0 %v2725
    %2803 = vmatpush2.bf16.msra.mxu0 %v2724
    %2804 = vmatprep.mubr.bf16.mxu0 %v2565
    %2805 = vmatmul.mubr.bf16.gmra.mxu0 %v2564
    %v2806 = vpop.f32.mrf.mxu0
    %v2807 = vadd.f32 %v2605, %v2806
    %v2808 = vpop.f32.mrf.mxu0
    %v2809 = vadd.f32 %v2609, %v2808
    %v2810 = vpop.f32.mrf.mxu0
    %v2811 = vpop.f32.mrf.mxu0
    %2812 = vdwg.mxu0
    %v2813 = vxor.u32 %v2807, 2147483648
    %v2814 = vxor.u32 %v2809, 2147483648
    %v2815 = vmul.f32 %v2813, 1.442695
    %v2816 = vpow.pop %v2815
    %v2817 = vmul.f32 %v2814, 1.442695
    %v2818 = vpow.pop %v2817
    %v2819 = vadd.f32 %v2816, 1.0
    %v2820 = vadd.f32 %v2818, 1.0
    %v2821 = vrcp.pop %v2819
    %v2822 = vmul.f32 1.0, %v2821
    %v2823 = vrcp.pop %v2820
    %v2824 = vmul.f32 1.0, %v2823
    %v2825 = vmul.f32 %v2807, %v2822
    %v2826 = vmul.f32 %v2809, %v2824
    %v2827 = vpack.c.bf16 %v2825, %v2825
    %v2828 = vpack.c.bf16 %v2826, %v2826
    %s2829 = scalar_lea.vmem [#allocation2], 2816
    %v2830 = vld [vmem:[%s2829] sm:$0xff]
    %v2831 = vld [vmem:[%s2829 + $0x8] sm:$0xff]
    %v2832 = vld [vmem:[%s2829 + $0x10] sm:$0xff]
    %v2833 = vld [vmem:[%s2829 + $0x18] sm:$0xff]
    %v2834 = vld [vmem:[%s2829 + $0x20] sm:$0xff]
    %v2835 = vld [vmem:[%s2829 + $0x28] sm:$0xff]
    %v2836 = vld [vmem:[%s2829 + $0x30] sm:$0xff]
    %v2837 = vld [vmem:[%s2829 + $0x38] sm:$0xff]
    %v2838 = vld [vmem:[%s2829 + $0x40] sm:$0xff]
    %v2839 = vld [vmem:[%s2829 + $0x48] sm:$0xff]
    %v2840 = vld [vmem:[%s2829 + $0x50] sm:$0xff]
    %v2841 = vld [vmem:[%s2829 + $0x58] sm:$0xff]
    %v2842 = vld [vmem:[%s2829 + $0x60] sm:$0xff]
    %v2843 = vld [vmem:[%s2829 + $0x68] sm:$0xff]
    %v2844 = vld [vmem:[%s2829 + $0x70] sm:$0xff]
    %v2845 = vld [vmem:[%s2829 + $0x78] sm:$0xff]
    %v2846 = vld [vmem:[%s2829 + $0x80] sm:$0xff]
    %v2847 = vld [vmem:[%s2829 + $0x88] sm:$0xff]
    %v2848 = vld [vmem:[%s2829 + $0x90] sm:$0xff]
    %v2849 = vld [vmem:[%s2829 + $0x98] sm:$0xff]
    %v2850 = vld [vmem:[%s2829 + $0xa0] sm:$0xff]
    %v2851 = vld [vmem:[%s2829 + $0xa8] sm:$0xff]
    %v2852 = vld [vmem:[%s2829 + $0xb0] sm:$0xff]
    %v2853 = vld [vmem:[%s2829 + $0xb8] sm:$0xff]
    %v2854 = vld [vmem:[%s2829 + $0xc0] sm:$0xff]
    %v2855 = vld [vmem:[%s2829 + $0xc8] sm:$0xff]
    %v2856 = vld [vmem:[%s2829 + $0xd0] sm:$0xff]
    %v2857 = vld [vmem:[%s2829 + $0xd8] sm:$0xff]
    %v2858 = vld [vmem:[%s2829 + $0xe0] sm:$0xff]
    %v2859 = vld [vmem:[%s2829 + $0xe8] sm:$0xff]
    %v2860 = vld [vmem:[%s2829 + $0xf0] sm:$0xff]
    %v2861 = vld [vmem:[%s2829 + $0xf8] sm:$0xff]
    %s2862 = scalar_lea.vmem [#allocation4], 19
    %v2863 = vld [vmem:[%s2862] ss:$8 sm:$0x3]
    %v2865 = vlaneseq
    %v2866 = vshrl.u32 %v2865, 7
    %v2867 = vsub.s32 0, %v2866
    %v2868 = vrot.slane %v2863, %v2867
    %v2869 = vlaneseq
    %v2870 = vshrl.u32 %v2869, 7
    %v2871 = vsub.s32 1, %v2870
    %v2872 = vrot.slane %v2863, %v2871
    %v2907 = vunpack.c.l.b16 %v2830
    %v2908 = vunpack.c.h.b16 %v2830
    %v2909 = vunpack.c.l.b16 %v2831
    %v2910 = vunpack.c.h.b16 %v2831
    %v2911 = vunpack.c.l.b16 %v2832
    %v2912 = vunpack.c.h.b16 %v2832
    %v2913 = vunpack.c.l.b16 %v2833
    %v2914 = vunpack.c.h.b16 %v2833
    %v2915 = vunpack.c.l.b16 %v2834
    %v2916 = vunpack.c.h.b16 %v2834
    %v2917 = vunpack.c.l.b16 %v2835
    %v2918 = vunpack.c.h.b16 %v2835
    %v2919 = vunpack.c.l.b16 %v2836
    %v2920 = vunpack.c.h.b16 %v2836
    %v2921 = vunpack.c.l.b16 %v2837
    %v2922 = vunpack.c.h.b16 %v2837
    %v2923 = vunpack.c.l.b16 %v2838
    %v2924 = vunpack.c.h.b16 %v2838
    %v2925 = vunpack.c.l.b16 %v2839
    %v2926 = vunpack.c.h.b16 %v2839
    %v2927 = vunpack.c.l.b16 %v2840
    %v2928 = vunpack.c.h.b16 %v2840
    %v2929 = vunpack.c.l.b16 %v2841
    %v2930 = vunpack.c.h.b16 %v2841
    %v2931 = vunpack.c.l.b16 %v2842
    %v2932 = vunpack.c.h.b16 %v2842
    %v2933 = vunpack.c.l.b16 %v2843
    %v2934 = vunpack.c.h.b16 %v2843
    %v2935 = vunpack.c.l.b16 %v2844
    %v2936 = vunpack.c.h.b16 %v2844
    %v2937 = vunpack.c.l.b16 %v2845
    %v2938 = vunpack.c.h.b16 %v2845
    %v2939 = vunpack.c.l.b16 %v2846
    %v2940 = vunpack.c.h.b16 %v2846
    %v2941 = vunpack.c.l.b16 %v2847
    %v2942 = vunpack.c.h.b16 %v2847
    %v2943 = vunpack.c.l.b16 %v2848
    %v2944 = vunpack.c.h.b16 %v2848
    %v2945 = vunpack.c.l.b16 %v2849
    %v2946 = vunpack.c.h.b16 %v2849
    %v2947 = vunpack.c.l.b16 %v2850
    %v2948 = vunpack.c.h.b16 %v2850
    %v2949 = vunpack.c.l.b16 %v2851
    %v2950 = vunpack.c.h.b16 %v2851
    %v2951 = vunpack.c.l.b16 %v2852
    %v2952 = vunpack.c.h.b16 %v2852
    %v2953 = vunpack.c.l.b16 %v2853
    %v2954 = vunpack.c.h.b16 %v2853
    %v2955 = vunpack.c.l.b16 %v2854
    %v2956 = vunpack.c.h.b16 %v2854
    %v2957 = vunpack.c.l.b16 %v2855
    %v2958 = vunpack.c.h.b16 %v2855
    %v2959 = vunpack.c.l.b16 %v2856
    %v2960 = vunpack.c.h.b16 %v2856
    %v2961 = vunpack.c.l.b16 %v2857
    %v2962 = vunpack.c.h.b16 %v2857
    %v2963 = vunpack.c.l.b16 %v2858
    %v2964 = vunpack.c.h.b16 %v2858
    %v2965 = vunpack.c.l.b16 %v2859
    %v2966 = vunpack.c.h.b16 %v2859
    %v2967 = vunpack.c.l.b16 %v2860
    %v2968 = vunpack.c.h.b16 %v2860
    %v2969 = vunpack.c.l.b16 %v2861
    %v2970 = vunpack.c.h.b16 %v2861
    %v2971 = vpack.c.b16 %v2909, %v2907
    %v2972 = vpack.c.b16 %v2910, %v2908
    %v2973 = vpack.c.b16 %v2913, %v2911
    %v2974 = vpack.c.b16 %v2914, %v2912
    %v2975 = vpack.c.b16 %v2917, %v2915
    %v2976 = vpack.c.b16 %v2918, %v2916
    %v2977 = vpack.c.b16 %v2921, %v2919
    %v2978 = vpack.c.b16 %v2922, %v2920
    %v2979 = vpack.c.b16 %v2925, %v2923
    %v2980 = vpack.c.b16 %v2926, %v2924
    %v2981 = vpack.c.b16 %v2929, %v2927
    %v2982 = vpack.c.b16 %v2930, %v2928
    %v2983 = vpack.c.b16 %v2933, %v2931
    %v2984 = vpack.c.b16 %v2934, %v2932
    %v2985 = vpack.c.b16 %v2937, %v2935
    %v2986 = vpack.c.b16 %v2938, %v2936
    %v2987 = vpack.c.b16 %v2941, %v2939
    %v2988 = vpack.c.b16 %v2942, %v2940
    %v2989 = vpack.c.b16 %v2945, %v2943
    %v2990 = vpack.c.b16 %v2946, %v2944
    %v2991 = vpack.c.b16 %v2949, %v2947
    %v2992 = vpack.c.b16 %v2950, %v2948
    %v2993 = vpack.c.b16 %v2953, %v2951
    %v2994 = vpack.c.b16 %v2954, %v2952
    %v2995 = vpack.c.b16 %v2957, %v2955
    %v2996 = vpack.c.b16 %v2958, %v2956
    %v2997 = vpack.c.b16 %v2961, %v2959
    %v2998 = vpack.c.b16 %v2962, %v2960
    %v2999 = vpack.c.b16 %v2965, %v2963
    %v3000 = vpack.c.b16 %v2966, %v2964
    %v3001 = vpack.c.b16 %v2969, %v2967
    %v3002 = vpack.c.b16 %v2970, %v2968
    %3035 = vmatprep.subr.bf16.mxu0 %v2986
    %3036 = vmatpush1.bf16.msra.mxu0 %v2985
    %3037 = vmatprep.subr.bf16.mxu0 %v2984
    %3038 = vmatpush1.bf16.msra.mxu0 %v2983
    %3039 = vmatprep.subr.bf16.mxu0 %v2982
    %3040 = vmatpush1.bf16.msra.mxu0 %v2981
    %3041 = vmatprep.subr.bf16.mxu0 %v2980
    %3042 = vmatpush1.bf16.msra.mxu0 %v2979
    %3043 = vmatprep.subr.bf16.mxu0 %v2978
    %3044 = vmatpush1.bf16.msra.mxu0 %v2977
    %3045 = vmatprep.subr.bf16.mxu0 %v2976
    %3046 = vmatpush1.bf16.msra.mxu0 %v2975
    %3047 = vmatprep.subr.bf16.mxu0 %v2974
    %3048 = vmatpush1.bf16.msra.mxu0 %v2973
    %3049 = vmatprep.subr.bf16.mxu0 %v2972
    %3050 = vmatpush1.bf16.msra.mxu0 %v2971
    %3051 = vmatprep.subr.bf16.mxu0 %v3002
    %3052 = vmatpush2.bf16.msra.mxu0 %v3001
    %3053 = vmatprep.subr.bf16.mxu0 %v3000
    %3054 = vmatpush2.bf16.msra.mxu0 %v2999
    %3055 = vmatprep.subr.bf16.mxu0 %v2998
    %3056 = vmatpush2.bf16.msra.mxu0 %v2997
    %3057 = vmatprep.subr.bf16.mxu0 %v2996
    %3058 = vmatpush2.bf16.msra.mxu0 %v2995
    %3059 = vmatprep.subr.bf16.mxu0 %v2994
    %3060 = vmatpush2.bf16.msra.mxu0 %v2993
    %3061 = vmatprep.subr.bf16.mxu0 %v2992
    %3062 = vmatpush2.bf16.msra.mxu0 %v2991
    %3063 = vmatprep.subr.bf16.mxu0 %v2990
    %3064 = vmatpush2.bf16.msra.mxu0 %v2989
    %3065 = vmatprep.subr.bf16.mxu0 %v2988
    %3066 = vmatpush2.bf16.msra.mxu0 %v2987
    %3067 = vmatprep.mubr.bf16.mxu0 %v2828
    %3068 = vmatmul.mubr.bf16.gmra.mxu0 %v2827
    %v3069 = vpop.f32.mrf.mxu0
    %v3070 = vadd.f32 %v2868, %v3069
    %v3071 = vpop.f32.mrf.mxu0
    %v3072 = vadd.f32 %v2872, %v3071
    %v3073 = vpop.f32.mrf.mxu0
    %v3074 = vpop.f32.mrf.mxu0
    %3075 = vdwg.mxu0
    %v3076 = vxor.u32 %v3070, 2147483648
    %v3077 = vxor.u32 %v3072, 2147483648
    %v3078 = vmul.f32 %v3076, 1.442695
    %v3079 = vpow.pop %v3078
    %v3080 = vmul.f32 %v3077, 1.442695
    %v3081 = vpow.pop %v3080
    %v3082 = vadd.f32 %v3079, 1.0
    %v3083 = vadd.f32 %v3081, 1.0
    %v3084 = vrcp.pop %v3082
    %v3085 = vmul.f32 1.0, %v3084
    %v3086 = vrcp.pop %v3083
    %v3087 = vmul.f32 1.0, %v3086
    %v3088 = vmul.f32 %v3070, %v3085
    %v3089 = vmul.f32 %v3072, %v3087
    %v3090 = vpack.c.bf16 %v3088, %v3088
    %v3091 = vpack.c.bf16 %v3089, %v3089
    %s3092 = scalar_lea.vmem [#allocation2], 3072
    %v3093 = vld [vmem:[%s3092] sm:$0xff]
    %v3094 = vld [vmem:[%s3092 + $0x8] sm:$0xff]
    %v3095 = vld [vmem:[%s3092 + $0x10] sm:$0xff]
    %v3096 = vld [vmem:[%s3092 + $0x18] sm:$0xff]
    %v3097 = vld [vmem:[%s3092 + $0x20] sm:$0xff]
    %v3098 = vld [vmem:[%s3092 + $0x28] sm:$0xff]
    %v3099 = vld [vmem:[%s3092 + $0x30] sm:$0xff]
    %v3100 = vld [vmem:[%s3092 + $0x38] sm:$0xff]
    %v3101 = vld [vmem:[%s3092 + $0x40] sm:$0xff]
    %v3102 = vld [vmem:[%s3092 + $0x48] sm:$0xff]
    %v3103 = vld [vmem:[%s3092 + $0x50] sm:$0xff]
    %v3104 = vld [vmem:[%s3092 + $0x58] sm:$0xff]
    %v3105 = vld [vmem:[%s3092 + $0x60] sm:$0xff]
    %v3106 = vld [vmem:[%s3092 + $0x68] sm:$0xff]
    %v3107 = vld [vmem:[%s3092 + $0x70] sm:$0xff]
    %v3108 = vld [vmem:[%s3092 + $0x78] sm:$0xff]
    %v3109 = vld [vmem:[%s3092 + $0x80] sm:$0xff]
    %v3110 = vld [vmem:[%s3092 + $0x88] sm:$0xff]
    %v3111 = vld [vmem:[%s3092 + $0x90] sm:$0xff]
    %v3112 = vld [vmem:[%s3092 + $0x98] sm:$0xff]
    %v3113 = vld [vmem:[%s3092 + $0xa0] sm:$0xff]
    %v3114 = vld [vmem:[%s3092 + $0xa8] sm:$0xff]
    %v3115 = vld [vmem:[%s3092 + $0xb0] sm:$0xff]
    %v3116 = vld [vmem:[%s3092 + $0xb8] sm:$0xff]
    %v3117 = vld [vmem:[%s3092 + $0xc0] sm:$0xff]
    %v3118 = vld [vmem:[%s3092 + $0xc8] sm:$0xff]
    %v3119 = vld [vmem:[%s3092 + $0xd0] sm:$0xff]
    %v3120 = vld [vmem:[%s3092 + $0xd8] sm:$0xff]
    %v3121 = vld [vmem:[%s3092 + $0xe0] sm:$0xff]
    %v3122 = vld [vmem:[%s3092 + $0xe8] sm:$0xff]
    %v3123 = vld [vmem:[%s3092 + $0xf0] sm:$0xff]
    %v3124 = vld [vmem:[%s3092 + $0xf8] sm:$0xff]
    %s3125 = scalar_lea.vmem [#allocation4], 20
    %v3126 = vld [vmem:[%s3125] ss:$8 sm:$0x3]
    %v3128 = vlaneseq
    %v3129 = vshrl.u32 %v3128, 7
    %v3130 = vsub.s32 0, %v3129
    %v3131 = vrot.slane %v3126, %v3130
    %v3132 = vlaneseq
    %v3133 = vshrl.u32 %v3132, 7
    %v3134 = vsub.s32 1, %v3133
    %v3135 = vrot.slane %v3126, %v3134
    %v3170 = vunpack.c.l.b16 %v3093
    %v3171 = vunpack.c.h.b16 %v3093
    %v3172 = vunpack.c.l.b16 %v3094
    %v3173 = vunpack.c.h.b16 %v3094
    %v3174 = vunpack.c.l.b16 %v3095
    %v3175 = vunpack.c.h.b16 %v3095
    %v3176 = vunpack.c.l.b16 %v3096
    %v3177 = vunpack.c.h.b16 %v3096
    %v3178 = vunpack.c.l.b16 %v3097
    %v3179 = vunpack.c.h.b16 %v3097
    %v3180 = vunpack.c.l.b16 %v3098
    %v3181 = vunpack.c.h.b16 %v3098
    %v3182 = vunpack.c.l.b16 %v3099
    %v3183 = vunpack.c.h.b16 %v3099
    %v3184 = vunpack.c.l.b16 %v3100
    %v3185 = vunpack.c.h.b16 %v3100
    %v3186 = vunpack.c.l.b16 %v3101
    %v3187 = vunpack.c.h.b16 %v3101
    %v3188 = vunpack.c.l.b16 %v3102
    %v3189 = vunpack.c.h.b16 %v3102
    %v3190 = vunpack.c.l.b16 %v3103
    %v3191 = vunpack.c.h.b16 %v3103
    %v3192 = vunpack.c.l.b16 %v3104
    %v3193 = vunpack.c.h.b16 %v3104
    %v3194 = vunpack.c.l.b16 %v3105
    %v3195 = vunpack.c.h.b16 %v3105
    %v3196 = vunpack.c.l.b16 %v3106
    %v3197 = vunpack.c.h.b16 %v3106
    %v3198 = vunpack.c.l.b16 %v3107
    %v3199 = vunpack.c.h.b16 %v3107
    %v3200 = vunpack.c.l.b16 %v3108
    %v3201 = vunpack.c.h.b16 %v3108
    %v3202 = vunpack.c.l.b16 %v3109
    %v3203 = vunpack.c.h.b16 %v3109
    %v3204 = vunpack.c.l.b16 %v3110
    %v3205 = vunpack.c.h.b16 %v3110
    %v3206 = vunpack.c.l.b16 %v3111
    %v3207 = vunpack.c.h.b16 %v3111
    %v3208 = vunpack.c.l.b16 %v3112
    %v3209 = vunpack.c.h.b16 %v3112
    %v3210 = vunpack.c.l.b16 %v3113
    %v3211 = vunpack.c.h.b16 %v3113
    %v3212 = vunpack.c.l.b16 %v3114
    %v3213 = vunpack.c.h.b16 %v3114
    %v3214 = vunpack.c.l.b16 %v3115
    %v3215 = vunpack.c.h.b16 %v3115
    %v3216 = vunpack.c.l.b16 %v3116
    %v3217 = vunpack.c.h.b16 %v3116
    %v3218 = vunpack.c.l.b16 %v3117
    %v3219 = vunpack.c.h.b16 %v3117
    %v3220 = vunpack.c.l.b16 %v3118
    %v3221 = vunpack.c.h.b16 %v3118
    %v3222 = vunpack.c.l.b16 %v3119
    %v3223 = vunpack.c.h.b16 %v3119
    %v3224 = vunpack.c.l.b16 %v3120
    %v3225 = vunpack.c.h.b16 %v3120
    %v3226 = vunpack.c.l.b16 %v3121
    %v3227 = vunpack.c.h.b16 %v3121
    %v3228 = vunpack.c.l.b16 %v3122
    %v3229 = vunpack.c.h.b16 %v3122
    %v3230 = vunpack.c.l.b16 %v3123
    %v3231 = vunpack.c.h.b16 %v3123
    %v3232 = vunpack.c.l.b16 %v3124
    %v3233 = vunpack.c.h.b16 %v3124
    %v3234 = vpack.c.b16 %v3172, %v3170
    %v3235 = vpack.c.b16 %v3173, %v3171
    %v3236 = vpack.c.b16 %v3176, %v3174
    %v3237 = vpack.c.b16 %v3177, %v3175
    %v3238 = vpack.c.b16 %v3180, %v3178
    %v3239 = vpack.c.b16 %v3181, %v3179
    %v3240 = vpack.c.b16 %v3184, %v3182
    %v3241 = vpack.c.b16 %v3185, %v3183
    %v3242 = vpack.c.b16 %v3188, %v3186
    %v3243 = vpack.c.b16 %v3189, %v3187
    %v3244 = vpack.c.b16 %v3192, %v3190
    %v3245 = vpack.c.b16 %v3193, %v3191
    %v3246 = vpack.c.b16 %v3196, %v3194
    %v3247 = vpack.c.b16 %v3197, %v3195
    %v3248 = vpack.c.b16 %v3200, %v3198
    %v3249 = vpack.c.b16 %v3201, %v3199
    %v3250 = vpack.c.b16 %v3204, %v3202
    %v3251 = vpack.c.b16 %v3205, %v3203
    %v3252 = vpack.c.b16 %v3208, %v3206
    %v3253 = vpack.c.b16 %v3209, %v3207
    %v3254 = vpack.c.b16 %v3212, %v3210
    %v3255 = vpack.c.b16 %v3213, %v3211
    %v3256 = vpack.c.b16 %v3216, %v3214
    %v3257 = vpack.c.b16 %v3217, %v3215
    %v3258 = vpack.c.b16 %v3220, %v3218
    %v3259 = vpack.c.b16 %v3221, %v3219
    %v3260 = vpack.c.b16 %v3224, %v3222
    %v3261 = vpack.c.b16 %v3225, %v3223
    %v3262 = vpack.c.b16 %v3228, %v3226
    %v3263 = vpack.c.b16 %v3229, %v3227
    %v3264 = vpack.c.b16 %v3232, %v3230
    %v3265 = vpack.c.b16 %v3233, %v3231
    %3298 = vmatprep.subr.bf16.mxu0 %v3249
    %3299 = vmatpush1.bf16.msra.mxu0 %v3248
    %3300 = vmatprep.subr.bf16.mxu0 %v3247
    %3301 = vmatpush1.bf16.msra.mxu0 %v3246
    %3302 = vmatprep.subr.bf16.mxu0 %v3245
    %3303 = vmatpush1.bf16.msra.mxu0 %v3244
    %3304 = vmatprep.subr.bf16.mxu0 %v3243
    %3305 = vmatpush1.bf16.msra.mxu0 %v3242
    %3306 = vmatprep.subr.bf16.mxu0 %v3241
    %3307 = vmatpush1.bf16.msra.mxu0 %v3240
    %3308 = vmatprep.subr.bf16.mxu0 %v3239
    %3309 = vmatpush1.bf16.msra.mxu0 %v3238
    %3310 = vmatprep.subr.bf16.mxu0 %v3237
    %3311 = vmatpush1.bf16.msra.mxu0 %v3236
    %3312 = vmatprep.subr.bf16.mxu0 %v3235
    %3313 = vmatpush1.bf16.msra.mxu0 %v3234
    %3314 = vmatprep.subr.bf16.mxu0 %v3265
    %3315 = vmatpush2.bf16.msra.mxu0 %v3264
    %3316 = vmatprep.subr.bf16.mxu0 %v3263
    %3317 = vmatpush2.bf16.msra.mxu0 %v3262
    %3318 = vmatprep.subr.bf16.mxu0 %v3261
    %3319 = vmatpush2.bf16.msra.mxu0 %v3260
    %3320 = vmatprep.subr.bf16.mxu0 %v3259
    %3321 = vmatpush2.bf16.msra.mxu0 %v3258
    %3322 = vmatprep.subr.bf16.mxu0 %v3257
    %3323 = vmatpush2.bf16.msra.mxu0 %v3256
    %3324 = vmatprep.subr.bf16.mxu0 %v3255
    %3325 = vmatpush2.bf16.msra.mxu0 %v3254
    %3326 = vmatprep.subr.bf16.mxu0 %v3253
    %3327 = vmatpush2.bf16.msra.mxu0 %v3252
    %3328 = vmatprep.subr.bf16.mxu0 %v3251
    %3329 = vmatpush2.bf16.msra.mxu0 %v3250
    %3330 = vmatprep.mubr.bf16.mxu0 %v3091
    %3331 = vmatmul.mubr.bf16.gmra.mxu0 %v3090
    %v3332 = vpop.f32.mrf.mxu0
    %v3333 = vadd.f32 %v3131, %v3332
    %v3334 = vpop.f32.mrf.mxu0
    %v3335 = vadd.f32 %v3135, %v3334
    %v3336 = vpop.f32.mrf.mxu0
    %v3337 = vpop.f32.mrf.mxu0
    %3338 = vdwg.mxu0
    %v3339 = vtanh.pop %v3333
    %v3340 = vtanh.pop %v3335
    %v3341 = vmul.f32 %v3339, 4.0
    %v3342 = vmul.f32 %v3340, 4.0
    %3343 = vst [vmem:[%s3] sm:$0xff] %v3341
    %3344 = vst [vmem:[%s3 + $0x8] sm:$0xff] %v3342
    // Predicated region
    $region22: #{actor_forward.1} parent=1 // pred_check
      _
    $region23: #{actor_forward.1} parent=1 // pred_check_branch
      %3346 = sbr.rel (0) target = $region25
    $region24: #{actor_forward.1} parent=1 // pred_region
      _
    $region25: #{actor_forward.1} parent=1 // pred_fallthru
      _
    // Predicated region
    $region26: #{actor_forward.1} parent=1 // pred_check
      _
    $region27: #{actor_forward.1} parent=1 // pred_check_branch
      %3348 = sbr.rel (0) target = $region29
    $region28: #{actor_forward.1} parent=1 // pred_region
      _
    $region29: #{actor_forward.1} parent=1 // pred_fallthru
      _
    %3349 = vsyncpa [#allocation3], 1
    %3350 = vsyncpa [#allocation5], 1

</llo_original>
